<compile_context>
chip_gen: v7x
topology: tpu7x:2x2x1
jax: 0.10.0
libtpu: 0.0.40
codegen_flags: <defaults>
</compile_context>

<pallas_src>
import functools

import jax
import jax.numpy as jnp
from jax import lax
from jax.experimental import pallas as pl
from jax.experimental.pallas import tpu as pltpu


KSIZE = 3      # kernel_size in the PyTorch module
LANE = 128     # TPU lane width
SUB = 8        # TPU sublane width


def _round_up(x, m):
    return ((x + m - 1) // m) * m


# ----------------------------------------------------------------------------
# Pallas kernel: the whole TCN (all TemporalBlocks) for one batch row
# ----------------------------------------------------------------------------
def _tcn_kernel(x_ref, w_ref, b_ref, o_ref, a_ref, h_ref, *,
                num_layers, L_round, L_valid, halo, c_in_pad, cp):
    # x_ref : (1, L_round, c_in_pad)          bf16  one batch row of the input
    # w_ref : (num_layers*2*KSIZE, cp, cp)    bf16  stacked per-tap conv weights
    # b_ref : (num_layers*2, 1, cp)           f32   stacked biases
    # o_ref : (1, L_round, cp)                bf16  one batch row of the output
    # a_ref : (L_round + 2*halo, cp)          bf16  activation slab (ping)
    # h_ref : (L_round + 2*halo, cp)          bf16  conv1-output slab (pong)
    D = halo
    zrow = jnp.zeros((D, cp), jnp.bfloat16)

    # Zero the halo rows of both slabs: every conv then sees zero padding exactly like
    # PyTorch's Conv1d (conv2's padding is real zeros, NOT relu(bias)).  Done every grid
    # step so the kernel carries no cross-step state (safe under core-parallel sharding).
    a_ref[0:D, :] = zrow
    a_ref[D + L_round:D + L_round + D, :] = zrow
    h_ref[0:D, :] = zrow
    h_ref[D + L_round:D + L_round + D, :] = zrow

    # Stage the input into the activation slab (zero-extend any extra channel columns).
    a_ref[D:D + L_round, 0:c_in_pad] = x_ref[0]
    if c_in_pad < cp:
        a_ref[D:D + L_round, c_in_pad:cp] = jnp.zeros(
            (L_round, cp - c_in_pad), jnp.bfloat16)

    tail = L_round - L_valid  # rows past the true sequence length (< 8)

    def conv_bias_relu(src_ref, idx, dilation):
        # Dilated K=3 conv as KSIZE per-tap MXU matmuls accumulated in f32
        # (no lane-axis concat temp).  Static slices; offsets -d, 0, +d.
        acc = jnp.dot(src_ref[D - dilation:D - dilation + L_round, :],
                      w_ref[idx * KSIZE + 0],
                      preferred_element_type=jnp.float32)
        for k in range(1, KSIZE):
            off = D + (k - 1) * dilation
            acc = acc + jnp.dot(src_ref[off:off + L_round, :],
                                w_ref[idx * KSIZE + k],
                                preferred_element_type=jnp.float32)
        return jnp.maximum(acc + b_ref[idx], 0.0)       # bias + ReLU in f32

    for i in range(num_layers):
        d = 2 ** i
        # conv1 + ReLU   (dropout is identity at inference)
        h = conv_bias_relu(a_ref, 2 * i + 0, d)
        h_ref[D:D + L_round, :] = h.astype(jnp.bfloat16)
        if tail:
            # PyTorch zero-pads conv2's input: rows past the valid sequence must be
            # exactly zero.  Statically gated; touches at most 7 rows.
            h_ref[D + L_valid:D + L_round, :] = jnp.zeros((tail, cp), jnp.bfloat16)
        # conv2 + ReLU
        y = conv_bias_relu(h_ref, 2 * i + 1, d)
        if i == num_layers - 1:
            o_ref[0] = y.astype(o_ref.dtype)            # tail rows sliced off outside
        else:
            a_ref[D:D + L_round, :] = y.astype(jnp.bfloat16)
            if tail:
                a_ref[D + L_valid:D + L_round, :] = jnp.zeros((tail, cp), jnp.bfloat16)


# ----------------------------------------------------------------------------
# pallas_call wrapper
# ----------------------------------------------------------------------------
def _dimension_semantics():
    # v7x has 2 TensorCores per chip: shard the batch grid axis across them.
    try:
        kind = jax.devices()[0].device_kind.lower()
    except Exception:
        kind = ""
    if "v7" in kind or "7x" in kind:
        return (pltpu.CORE_PARALLEL,)
    return ("parallel",)


def _const_block_spec(shape):
    # Weights / biases have a constant index_map: keep them resident and single-buffered
    # (double-buffering a never-changing block just doubles its VMEM; matters on v7x).
    ndim = len(shape)
    index_map = lambda b: (0,) * ndim
    try:
        return pl.BlockSpec(shape, index_map, pipeline_mode=pl.Buffered(1))
    except Exception:
        return pl.BlockSpec(shape, index_map)


def _tcn_pallas(x_pad, w_all, b_all, *, num_layers, L_valid, halo, cp):
    B, L_round, c_in_pad = x_pad.shape
    slab_rows = L_round + 2 * halo

    # VMEM budget: double-buffered in/out blocks + resident weights + two activation slabs.
    need = (2 * L_round * c_in_pad * 2 + 2 * L_round * cp * 2
            + 2 * w_all.size * 2 + 2 * b_all.size * 4
            + 2 * slab_rows * cp * 2)
    phys = 64 << 20                      # conservative default (v7x physical VMEM)
    try:
        phys = int(pltpu.get_tpu_info().vmem_capacity_bytes)
    except Exception:
        pass
    cap = int(phys * 0.9)
    vmem_limit = int(min(max(2 * need, 32 << 20), cap))
    # TODO(synk): add an L-tiled multi-pass fallback for sequences too long to keep one
    # batch row resident in VMEM.
    assert need <= vmem_limit, (
        f"fused TCN kernel needs ~{need} B of VMEM but only {vmem_limit} B is available")

    kernel = functools.partial(
        _tcn_kernel, num_layers=num_layers, L_round=L_round, L_valid=L_valid,
        halo=halo, c_in_pad=c_in_pad, cp=cp)

    return pl.pallas_call(
        kernel,
        out_shape=jax.ShapeDtypeStruct((B, L_round, cp), jnp.bfloat16),
        grid_spec=pltpu.PrefetchScalarGridSpec(
            num_scalar_prefetch=0,
            grid=(B,),
            in_specs=[
                pl.BlockSpec((1, L_round, c_in_pad), lambda b: (b, 0, 0)),
                _const_block_spec(w_all.shape),
                _const_block_spec(b_all.shape),
            ],
            out_specs=pl.BlockSpec((1, L_round, cp), lambda b: (b, 0, 0)),
            scratch_shapes=[
                pltpu.VMEM((slab_rows, cp), jnp.bfloat16),   # activation slab (ping)
                pltpu.VMEM((slab_rows, cp), jnp.bfloat16),   # conv1-output slab (pong)
            ],
        ),
        compiler_params=pltpu.CompilerParams(
            dimension_semantics=_dimension_semantics(),
            vmem_limit_bytes=vmem_limit,
        ),
    )(x_pad, w_all, b_all)


# ----------------------------------------------------------------------------
# Parameter init (mirrors PyTorch structure / Conv1d default init scale) & one-time prep
# ----------------------------------------------------------------------------
def init_tcn_params(key, input_size, hidden_size, num_layers, kernel_size=KSIZE):
    num_channels = [input_size] + [hidden_size] * (num_layers - 1) + [hidden_size]
    params = []
    for i in range(num_layers):
        c_in, c_out = num_channels[i], num_channels[i + 1]
        layer = {}
        for name, (ci, co) in (("conv1", (c_in, c_out)), ("conv2", (c_out, c_out))):
            key, kw, kb = jax.random.split(key, 3)
            bound = 1.0 / jnp.sqrt(ci * kernel_size)
            # tap-major (K, C_in, C_out) for the channels-last kernel / NWC conv reference
            w = jax.random.uniform(kw, (kernel_size, ci, co), jnp.float32, -bound, bound)
            bias = jax.random.uniform(kb, (co,), jnp.float32, -bound, bound)
            layer[name] = (w, bias)
        layer["dilation"] = 2 ** i
        params.append(layer)
    return params


def prepare_tcn_params(params):
    """One-time host-side prep (do NOT repeat per forward): pad all channel counts to a
    common 128-lane multiple, stack every conv's weights/biases into one tensor, cast bf16."""
    num_layers = len(params)
    chans = [params[0]["conv1"][0].shape[1]] + [l["conv2"][0].shape[2] for l in params]
    cp = max(_round_up(c, LANE) for c in chans)
    hidden_size = params[-1]["conv2"][0].shape[2]

    w_all = jnp.zeros((num_layers * 2 * KSIZE, cp, cp), jnp.float32)
    b_all = jnp.zeros((num_layers * 2, 1, cp), jnp.float32)
    for i, layer in enumerate(params):
        for c, name in enumerate(("conv1", "conv2")):
            w, bias = layer[name]
            ci, co = w.shape[1], w.shape[2]
            idx = 2 * i + c
            w_all = w_all.at[idx * KSIZE:(idx + 1) * KSIZE, :ci, :co].set(w)
            b_all = b_all.at[idx, 0, :co].set(bias)
    return {
        "w_all": w_all.astype(jnp.bfloat16),
        "b_all": b_all,
        "num_layers": num_layers,
        "hidden_size": hidden_size,
        "cp": cp,
        # zero-halo rows per slab side: >= the largest dilation, rounded to a sublane multiple
        "halo": _round_up(2 ** (num_layers - 1), SUB),
    }


# ----------------------------------------------------------------------------
# TCN forward
# ----------------------------------------------------------------------------
@functools.partial(jax.jit, static_argnames=("num_layers", "hidden_size", "cp", "halo"))
def _tcn_forward_impl(w_all, b_all, x_enc, *, num_layers, hidden_size, cp, halo):
    B, L, c_in = x_enc.shape
    L_round = _round_up(L, SUB)
    c_in_pad = _round_up(c_in, LANE)
    # Channels-last (the module's NCL<->NLC permutes cancel), channel-padded,
    # length-rounded, bf16 - the only host-side data movement before the kernel.
    x = jnp.zeros((B, L_round, c_in_pad), jnp.bfloat16)
    x = x.at[:, :L, :c_in].set(x_enc.astype(jnp.bfloat16))
    out = _tcn_pallas(x, w_all, b_all, num_layers=num_layers, L_valid=L,
                      halo=halo, cp=cp)
    return out[:, :L, :hidden_size].astype(jnp.float32)


def tcn_forward(prepped, x_enc):
    """x_enc: (B, L, input_size) float32 -> (B, L, hidden_size) float32."""
    return _tcn_forward_impl(prepped["w_all"], prepped["b_all"], x_enc,
                             num_layers=prepped["num_layers"],
                             hidden_size=prepped["hidden_size"],
                             cp=prepped["cp"], halo=prepped["halo"])


# ----------------------------------------------------------------------------
# Pure-JAX reference (mirrors the kernel's bf16 operand / f32 accumulate policy)
# ----------------------------------------------------------------------------
def _ref_tcn(params, x_enc):
    x = x_enc.astype(jnp.bfloat16)
    for layer in params:
        d = layer["dilation"]
        for name in ("conv1", "conv2"):
            w, bias = layer[name]
            out = lax.conv_general_dilated(
                x, w.astype(jnp.bfloat16),
                window_strides=(1,), padding=[(d, d)], rhs_dilation=(d,),
                dimension_numbers=("NWC", "WIO", "NWC"),
                preferred_element_type=jnp.float32)
            x = jnp.maximum(out + bias[None, None, :], 0.0).astype(jnp.bfloat16)
    return x.astype(jnp.float32)


if __name__ == "__main__":
    configs = [
        # (batch, seq_len, input_size, hidden_size, num_layers)
        (2, 8, 4, 32, 2),     # aligned sequence length
        (2, 13, 4, 32, 3),    # ragged length + deeper dilation: exercises halo/tail zeroing
    ]
    key = jax.random.PRNGKey(0)
    for (batch_size, seq_len, input_size, hidden_size, num_layers) in configs:
        key, kp, kx = jax.random.split(key, 3)
        params = init_tcn_params(kp, input_size, hidden_size, num_layers)
        prepped = prepare_tcn_params(params)
        x_enc = jax.random.normal(kx, (batch_size, seq_len, input_size), jnp.float32)

        out = jax.block_until_ready(tcn_forward(prepped, x_enc))
        ref = jax.block_until_ready(_ref_tcn(params, x_enc))

        assert out.shape == (batch_size, seq_len, hidden_size), out.shape
        err = jnp.max(jnp.abs(out - ref))
        assert jnp.allclose(out, ref, atol=2e-2, rtol=2e-2), (
            f"mismatch vs JAX reference for config "
            f"{(batch_size, seq_len, input_size, hidden_size, num_layers)}: max abs err {err}")
    print("KERNEL_OK")
</pallas_src>

<mosaic_0001>
module attributes {stable_mosaic.version = 11 : i64} {
  func.func @_tcn_kernel(%arg0: i32, %arg1: memref<1x8x128xbf16, #tpu.memory_space<vmem>>, %arg2: memref<12x128x128xbf16, #tpu.memory_space<vmem>>, %arg3: memref<4x1x128xf32, #tpu.memory_space<vmem>>, %arg4: memref<1x8x128xbf16, #tpu.memory_space<vmem>>, %arg5: memref<24x128xbf16, #tpu.memory_space<vmem>>, %arg6: memref<24x128xbf16, #tpu.memory_space<vmem>>) attributes {dimension_semantics = [#tpu.dimension_semantics<parallel>], iteration_bounds = array<i64: 2>, scalar_prefetch = 0 : i64, scratch_operands = 2 : i64, tpu.core_type = #tpu.core_type<tc>, window_params = [{transform_indices = @transform_0, window_bounds = array<i64: 1, 8, 128>}, {pipeline_mode = #tpu.pipeline_mode<synchronous>, transform_indices = @transform_1, window_bounds = array<i64: 12, 128, 128>}, {pipeline_mode = #tpu.pipeline_mode<synchronous>, transform_indices = @transform_2, window_bounds = array<i64: 4, 1, 128>}, {transform_indices = @transform_3, window_bounds = array<i64: 1, 8, 128>}]} {
    %cst = arith.constant 0.000000e+00 : bf16
    %0 = vector.broadcast %cst : bf16 to vector<8x128xbf16>
    %c0 = arith.constant 0 : index
    %c0_0 = arith.constant 0 : index
    %1 = vector.load %arg5[%c0, %c0_0] : memref<24x128xbf16, #tpu.memory_space<vmem>>, vector<8x128xbf16>
    tpu.vector_store %arg5[%c0, %c0_0], %0 {strides = array<i32>} : memref<24x128xbf16, #tpu.memory_space<vmem>>, vector<8x128xbf16>,
    %c16 = arith.constant 16 : index
    %c0_1 = arith.constant 0 : index
    %2 = vector.load %arg5[%c16, %c0_1] : memref<24x128xbf16, #tpu.memory_space<vmem>>, vector<8x128xbf16>
    tpu.vector_store %arg5[%c16, %c0_1], %0 {strides = array<i32>} : memref<24x128xbf16, #tpu.memory_space<vmem>>, vector<8x128xbf16>,
    %c0_2 = arith.constant 0 : index
    %c0_3 = arith.constant 0 : index
    %3 = vector.load %arg6[%c0_2, %c0_3] : memref<24x128xbf16, #tpu.memory_space<vmem>>, vector<8x128xbf16>
    tpu.vector_store %arg6[%c0_2, %c0_3], %0 {strides = array<i32>} : memref<24x128xbf16, #tpu.memory_space<vmem>>, vector<8x128xbf16>,
    %c16_4 = arith.constant 16 : index
    %c0_5 = arith.constant 0 : index
    %4 = vector.load %arg6[%c16_4, %c0_5] : memref<24x128xbf16, #tpu.memory_space<vmem>>, vector<8x128xbf16>
    tpu.vector_store %arg6[%c16_4, %c0_5], %0 {strides = array<i32>} : memref<24x128xbf16, #tpu.memory_space<vmem>>, vector<8x128xbf16>,
    %c0_6 = arith.constant 0 : index
    %c0_7 = arith.constant 0 : index
    %c0_8 = arith.constant 0 : index
    %5 = vector.load %arg1[%c0_6, %c0_7, %c0_8] : memref<1x8x128xbf16, #tpu.memory_space<vmem>>, vector<1x8x128xbf16>
    %6 = vector.shape_cast %5 : vector<1x8x128xbf16> to vector<8x128xbf16>
    %c8 = arith.constant 8 : index
    %c0_9 = arith.constant 0 : index
    %7 = vector.load %arg5[%c8, %c0_9] : memref<24x128xbf16, #tpu.memory_space<vmem>>, vector<8x128xbf16>
    tpu.vector_store %arg5[%c8, %c0_9], %6 {strides = array<i32>} : memref<24x128xbf16, #tpu.memory_space<vmem>>, vector<8x128xbf16>,
    %c7 = arith.constant 7 : index
    %c0_10 = arith.constant 0 : index
    %8 = vector.load %arg5[%c7, %c0_10] : memref<24x128xbf16, #tpu.memory_space<vmem>>, vector<8x128xbf16>
    %c0_11 = arith.constant 0 : index
    %c0_12 = arith.constant 0 : index
    %c0_13 = arith.constant 0 : index
    %9 = vector.load %arg2[%c0_11, %c0_12, %c0_13] : memref<12x128x128xbf16, #tpu.memory_space<vmem>>, vector<1x128x128xbf16>
    %10 = vector.shape_cast %9 : vector<1x128x128xbf16> to vector<128x128xbf16>
    %cst_14 = arith.constant dense<0.000000e+00> : vector<8x128xf32>
    %11 = tpu.matmul %8, %10, %cst_14 {dimension_numbers = #tpu.dot_dimension_numbers<[1], [0], [0], [1], [0, 0, 1, 1], [], []>} : vector<8x128xbf16>, vector<128x128xbf16>, vector<8x128xf32> -> vector<8x128xf32>
    %c8_15 = arith.constant 8 : index
    %c0_16 = arith.constant 0 : index
    %12 = vector.load %arg5[%c8_15, %c0_16] : memref<24x128xbf16, #tpu.memory_space<vmem>>, vector<8x128xbf16>
    %c1 = arith.constant 1 : index
    %c0_17 = arith.constant 0 : index
    %c0_18 = arith.constant 0 : index
    %13 = vector.load %arg2[%c1, %c0_17, %c0_18] : memref<12x128x128xbf16, #tpu.memory_space<vmem>>, vector<1x128x128xbf16>
    %14 = vector.shape_cast %13 : vector<1x128x128xbf16> to vector<128x128xbf16>
    %cst_19 = arith.constant dense<0.000000e+00> : vector<8x128xf32>
    %15 = tpu.matmul %12, %14, %cst_19 {dimension_numbers = #tpu.dot_dimension_numbers<[1], [0], [0], [1], [0, 0, 1, 1], [], []>} : vector<8x128xbf16>, vector<128x128xbf16>, vector<8x128xf32> -> vector<8x128xf32>
    %16 = arith.addf %11, %15 : vector<8x128xf32>
    %c9 = arith.constant 9 : index
    %c0_20 = arith.constant 0 : index
    %17 = vector.load %arg5[%c9, %c0_20] : memref<24x128xbf16, #tpu.memory_space<vmem>>, vector<8x128xbf16>
    %c2 = arith.constant 2 : index
    %c0_21 = arith.constant 0 : index
    %c0_22 = arith.constant 0 : index
    %18 = vector.load %arg2[%c2, %c0_21, %c0_22] : memref<12x128x128xbf16, #tpu.memory_space<vmem>>, vector<1x128x128xbf16>
    %19 = vector.shape_cast %18 : vector<1x128x128xbf16> to vector<128x128xbf16>
    %cst_23 = arith.constant dense<0.000000e+00> : vector<8x128xf32>
    %20 = tpu.matmul %17, %19, %cst_23 {dimension_numbers = #tpu.dot_dimension_numbers<[1], [0], [0], [1], [0, 0, 1, 1], [], []>} : vector<8x128xbf16>, vector<128x128xbf16>, vector<8x128xf32> -> vector<8x128xf32>
    %21 = arith.addf %16, %20 : vector<8x128xf32>
    %c0_24 = arith.constant 0 : index
    %c0_25 = arith.constant 0 : index
    %c0_26 = arith.constant 0 : index
    %22 = vector.load %arg3[%c0_24, %c0_25, %c0_26] : memref<4x1x128xf32, #tpu.memory_space<vmem>>, vector<1x1x128xf32>
    %23 = vector.shape_cast %22 : vector<1x1x128xf32> to vector<1x128xf32>
    %24 = vector.broadcast %23 : vector<1x128xf32> to vector<8x128xf32>
    %25 = arith.addf %21, %24 : vector<8x128xf32>
    %cst_27 = arith.constant 0.000000e+00 : f32
    %26 = vector.broadcast %cst_27 : f32 to vector<8x128xf32>
    %27 = arith.maximumf %25, %26 : vector<8x128xf32>
    %28 = arith.truncf %27 : vector<8x128xf32> to vector<8x128xbf16>
    %c8_28 = arith.constant 8 : index
    %c0_29 = arith.constant 0 : index
    %29 = vector.load %arg6[%c8_28, %c0_29] : memref<24x128xbf16, #tpu.memory_space<vmem>>, vector<8x128xbf16>
    tpu.vector_store %arg6[%c8_28, %c0_29], %28 {strides = array<i32>} : memref<24x128xbf16, #tpu.memory_space<vmem>>, vector<8x128xbf16>,
    %c7_30 = arith.constant 7 : index
    %c0_31 = arith.constant 0 : index
    %30 = vector.load %arg6[%c7_30, %c0_31] : memref<24x128xbf16, #tpu.memory_space<vmem>>, vector<8x128xbf16>
    %c3 = arith.constant 3 : index
    %c0_32 = arith.constant 0 : index
    %c0_33 = arith.constant 0 : index
    %31 = vector.load %arg2[%c3, %c0_32, %c0_33] : memref<12x128x128xbf16, #tpu.memory_space<vmem>>, vector<1x128x128xbf16>
    %32 = vector.shape_cast %31 : vector<1x128x128xbf16> to vector<128x128xbf16>
    %cst_34 = arith.constant dense<0.000000e+00> : vector<8x128xf32>
    %33 = tpu.matmul %30, %32, %cst_34 {dimension_numbers = #tpu.dot_dimension_numbers<[1], [0], [0], [1], [0, 0, 1, 1], [], []>} : vector<8x128xbf16>, vector<128x128xbf16>, vector<8x128xf32> -> vector<8x128xf32>
    %c8_35 = arith.constant 8 : index
    %c0_36 = arith.constant 0 : index
    %34 = vector.load %arg6[%c8_35, %c0_36] : memref<24x128xbf16, #tpu.memory_space<vmem>>, vector<8x128xbf16>
    %c4 = arith.constant 4 : index
    %c0_37 = arith.constant 0 : index
    %c0_38 = arith.constant 0 : index
    %35 = vector.load %arg2[%c4, %c0_37, %c0_38] : memref<12x128x128xbf16, #tpu.memory_space<vmem>>, vector<1x128x128xbf16>
    %36 = vector.shape_cast %35 : vector<1x128x128xbf16> to vector<128x128xbf16>
    %cst_39 = arith.constant dense<0.000000e+00> : vector<8x128xf32>
    %37 = tpu.matmul %34, %36, %cst_39 {dimension_numbers = #tpu.dot_dimension_numbers<[1], [0], [0], [1], [0, 0, 1, 1], [], []>} : vector<8x128xbf16>, vector<128x128xbf16>, vector<8x128xf32> -> vector<8x128xf32>
    %38 = arith.addf %33, %37 : vector<8x128xf32>
    %c9_40 = arith.constant 9 : index
    %c0_41 = arith.constant 0 : index
    %39 = vector.load %arg6[%c9_40, %c0_41] : memref<24x128xbf16, #tpu.memory_space<vmem>>, vector<8x128xbf16>
    %c5 = arith.constant 5 : index
    %c0_42 = arith.constant 0 : index
    %c0_43 = arith.constant 0 : index
    %40 = vector.load %arg2[%c5, %c0_42, %c0_43] : memref<12x128x128xbf16, #tpu.memory_space<vmem>>, vector<1x128x128xbf16>
    %41 = vector.shape_cast %40 : vector<1x128x128xbf16> to vector<128x128xbf16>
    %cst_44 = arith.constant dense<0.000000e+00> : vector<8x128xf32>
    %42 = tpu.matmul %39, %41, %cst_44 {dimension_numbers = #tpu.dot_dimension_numbers<[1], [0], [0], [1], [0, 0, 1, 1], [], []>} : vector<8x128xbf16>, vector<128x128xbf16>, vector<8x128xf32> -> vector<8x128xf32>
    %43 = arith.addf %38, %42 : vector<8x128xf32>
    %c1_45 = arith.constant 1 : index
    %c0_46 = arith.constant 0 : index
    %c0_47 = arith.constant 0 : index
    %44 = vector.load %arg3[%c1_45, %c0_46, %c0_47] : memref<4x1x128xf32, #tpu.memory_space<vmem>>, vector<1x1x128xf32>
    %45 = vector.shape_cast %44 : vector<1x1x128xf32> to vector<1x128xf32>
    %46 = vector.broadcast %45 : vector<1x128xf32> to vector<8x128xf32>
    %47 = arith.addf %43, %46 : vector<8x128xf32>
    %cst_48 = arith.constant 0.000000e+00 : f32
    %48 = vector.broadcast %cst_48 : f32 to vector<8x128xf32>
    %49 = arith.maximumf %47, %48 : vector<8x128xf32>
    %50 = arith.truncf %49 : vector<8x128xf32> to vector<8x128xbf16>
    %c8_49 = arith.constant 8 : index
    %c0_50 = arith.constant 0 : index
    %51 = vector.load %arg5[%c8_49, %c0_50] : memref<24x128xbf16, #tpu.memory_space<vmem>>, vector<8x128xbf16>
    tpu.vector_store %arg5[%c8_49, %c0_50], %50 {strides = array<i32>} : memref<24x128xbf16, #tpu.memory_space<vmem>>, vector<8x128xbf16>,
    %c6 = arith.constant 6 : index
    %c0_51 = arith.constant 0 : index
    %52 = vector.load %arg5[%c6, %c0_51] : memref<24x128xbf16, #tpu.memory_space<vmem>>, vector<8x128xbf16>
    %c6_52 = arith.constant 6 : index
    %c0_53 = arith.constant 0 : index
    %c0_54 = arith.constant 0 : index
    %53 = vector.load %arg2[%c6_52, %c0_53, %c0_54] : memref<12x128x128xbf16, #tpu.memory_space<vmem>>, vector<1x128x128xbf16>
    %54 = vector.shape_cast %53 : vector<1x128x128xbf16> to vector<128x128xbf16>
    %cst_55 = arith.constant dense<0.000000e+00> : vector<8x128xf32>
    %55 = tpu.matmul %52, %54, %cst_55 {dimension_numbers = #tpu.dot_dimension_numbers<[1], [0], [0], [1], [0, 0, 1, 1], [], []>} : vector<8x128xbf16>, vector<128x128xbf16>, vector<8x128xf32> -> vector<8x128xf32>
    %c8_56 = arith.constant 8 : index
    %c0_57 = arith.constant 0 : index
    %56 = vector.load %arg5[%c8_56, %c0_57] : memref<24x128xbf16, #tpu.memory_space<vmem>>, vector<8x128xbf16>
    %c7_58 = arith.constant 7 : index
    %c0_59 = arith.constant 0 : index
    %c0_60 = arith.constant 0 : index
    %57 = vector.load %arg2[%c7_58, %c0_59, %c0_60] : memref<12x128x128xbf16, #tpu.memory_space<vmem>>, vector<1x128x128xbf16>
    %58 = vector.shape_cast %57 : vector<1x128x128xbf16> to vector<128x128xbf16>
    %cst_61 = arith.constant dense<0.000000e+00> : vector<8x128xf32>
    %59 = tpu.matmul %56, %58, %cst_61 {dimension_numbers = #tpu.dot_dimension_numbers<[1], [0], [0], [1], [0, 0, 1, 1], [], []>} : vector<8x128xbf16>, vector<128x128xbf16>, vector<8x128xf32> -> vector<8x128xf32>
    %60 = arith.addf %55, %59 : vector<8x128xf32>
    %c10 = arith.constant 10 : index
    %c0_62 = arith.constant 0 : index
    %61 = vector.load %arg5[%c10, %c0_62] : memref<24x128xbf16, #tpu.memory_space<vmem>>, vector<8x128xbf16>
    %c8_63 = arith.constant 8 : index
    %c0_64 = arith.constant 0 : index
    %c0_65 = arith.constant 0 : index
    %62 = vector.load %arg2[%c8_63, %c0_64, %c0_65] : memref<12x128x128xbf16, #tpu.memory_space<vmem>>, vector<1x128x128xbf16>
    %63 = vector.shape_cast %62 : vector<1x128x128xbf16> to vector<128x128xbf16>
    %cst_66 = arith.constant dense<0.000000e+00> : vector<8x128xf32>
    %64 = tpu.matmul %61, %63, %cst_66 {dimension_numbers = #tpu.dot_dimension_numbers<[1], [0], [0], [1], [0, 0, 1, 1], [], []>} : vector<8x128xbf16>, vector<128x128xbf16>, vector<8x128xf32> -> vector<8x128xf32>
    %65 = arith.addf %60, %64 : vector<8x128xf32>
    %c2_67 = arith.constant 2 : index
    %c0_68 = arith.constant 0 : index
    %c0_69 = arith.constant 0 : index
    %66 = vector.load %arg3[%c2_67, %c0_68, %c0_69] : memref<4x1x128xf32, #tpu.memory_space<vmem>>, vector<1x1x128xf32>
    %67 = vector.shape_cast %66 : vector<1x1x128xf32> to vector<1x128xf32>
    %68 = vector.broadcast %67 : vector<1x128xf32> to vector<8x128xf32>
    %69 = arith.addf %65, %68 : vector<8x128xf32>
    %cst_70 = arith.constant 0.000000e+00 : f32
    %70 = vector.broadcast %cst_70 : f32 to vector<8x128xf32>
    %71 = arith.maximumf %69, %70 : vector<8x128xf32>
    %72 = arith.truncf %71 : vector<8x128xf32> to vector<8x128xbf16>
    %c8_71 = arith.constant 8 : index
    %c0_72 = arith.constant 0 : index
    %73 = vector.load %arg6[%c8_71, %c0_72] : memref<24x128xbf16, #tpu.memory_space<vmem>>, vector<8x128xbf16>
    tpu.vector_store %arg6[%c8_71, %c0_72], %72 {strides = array<i32>} : memref<24x128xbf16, #tpu.memory_space<vmem>>, vector<8x128xbf16>,
    %c6_73 = arith.constant 6 : index
    %c0_74 = arith.constant 0 : index
    %74 = vector.load %arg6[%c6_73, %c0_74] : memref<24x128xbf16, #tpu.memory_space<vmem>>, vector<8x128xbf16>
    %c9_75 = arith.constant 9 : index
    %c0_76 = arith.constant 0 : index
    %c0_77 = arith.constant 0 : index
    %75 = vector.load %arg2[%c9_75, %c0_76, %c0_77] : memref<12x128x128xbf16, #tpu.memory_space<vmem>>, vector<1x128x128xbf16>
    %76 = vector.shape_cast %75 : vector<1x128x128xbf16> to vector<128x128xbf16>
    %cst_78 = arith.constant dense<0.000000e+00> : vector<8x128xf32>
    %77 = tpu.matmul %74, %76, %cst_78 {dimension_numbers = #tpu.dot_dimension_numbers<[1], [0], [0], [1], [0, 0, 1, 1], [], []>} : vector<8x128xbf16>, vector<128x128xbf16>, vector<8x128xf32> -> vector<8x128xf32>
    %c8_79 = arith.constant 8 : index
    %c0_80 = arith.constant 0 : index
    %78 = vector.load %arg6[%c8_79, %c0_80] : memref<24x128xbf16, #tpu.memory_space<vmem>>, vector<8x128xbf16>
    %c10_81 = arith.constant 10 : index
    %c0_82 = arith.constant 0 : index
    %c0_83 = arith.constant 0 : index
    %79 = vector.load %arg2[%c10_81, %c0_82, %c0_83] : memref<12x128x128xbf16, #tpu.memory_space<vmem>>, vector<1x128x128xbf16>
    %80 = vector.shape_cast %79 : vector<1x128x128xbf16> to vector<128x128xbf16>
    %cst_84 = arith.constant dense<0.000000e+00> : vector<8x128xf32>
    %81 = tpu.matmul %78, %80, %cst_84 {dimension_numbers = #tpu.dot_dimension_numbers<[1], [0], [0], [1], [0, 0, 1, 1], [], []>} : vector<8x128xbf16>, vector<128x128xbf16>, vector<8x128xf32> -> vector<8x128xf32>
    %82 = arith.addf %77, %81 : vector<8x128xf32>
    %c10_85 = arith.constant 10 : index
    %c0_86 = arith.constant 0 : index
    %83 = vector.load %arg6[%c10_85, %c0_86] : memref<24x128xbf16, #tpu.memory_space<vmem>>, vector<8x128xbf16>
    %c11 = arith.constant 11 : index
    %c0_87 = arith.constant 0 : index
    %c0_88 = arith.constant 0 : index
    %84 = vector.load %arg2[%c11, %c0_87, %c0_88] : memref<12x128x128xbf16, #tpu.memory_space<vmem>>, vector<1x128x128xbf16>
    %85 = vector.shape_cast %84 : vector<1x128x128xbf16> to vector<128x128xbf16>
    %cst_89 = arith.constant dense<0.000000e+00> : vector<8x128xf32>
    %86 = tpu.matmul %83, %85, %cst_89 {dimension_numbers = #tpu.dot_dimension_numbers<[1], [0], [0], [1], [0, 0, 1, 1], [], []>} : vector<8x128xbf16>, vector<128x128xbf16>, vector<8x128xf32> -> vector<8x128xf32>
    %87 = arith.addf %82, %86 : vector<8x128xf32>
    %c3_90 = arith.constant 3 : index
    %c0_91 = arith.constant 0 : index
    %c0_92 = arith.constant 0 : index
    %88 = vector.load %arg3[%c3_90, %c0_91, %c0_92] : memref<4x1x128xf32, #tpu.memory_space<vmem>>, vector<1x1x128xf32>
    %89 = vector.shape_cast %88 : vector<1x1x128xf32> to vector<1x128xf32>
    %90 = vector.broadcast %89 : vector<1x128xf32> to vector<8x128xf32>
    %91 = arith.addf %87, %90 : vector<8x128xf32>
    %cst_93 = arith.constant 0.000000e+00 : f32
    %92 = vector.broadcast %cst_93 : f32 to vector<8x128xf32>
    %93 = arith.maximumf %91, %92 : vector<8x128xf32>
    %94 = arith.truncf %93 : vector<8x128xf32> to vector<8x128xbf16>
    %c0_94 = arith.constant 0 : index
    %c0_95 = arith.constant 0 : index
    %c0_96 = arith.constant 0 : index
    %95 = vector.load %arg4[%c0_94, %c0_95, %c0_96] : memref<1x8x128xbf16, #tpu.memory_space<vmem>>, vector<1x8x128xbf16>
    %96 = vector.shape_cast %95 : vector<1x8x128xbf16> to vector<8x128xbf16>
    %97 = vector.shape_cast %94 : vector<8x128xbf16> to vector<1x8x128xbf16>
    tpu.vector_store %arg4[%c0_94, %c0_95, %c0_96], %97 {strides = array<i32>} : memref<1x8x128xbf16, #tpu.memory_space<vmem>>, vector<1x8x128xbf16>,
    return
  }
  func.func @transform_0(%arg0: i32) -> (i32, i32, i32) {
    %c0_i32 = arith.constant 0 : i32
    %c0_i32_0 = arith.constant 0 : i32
    %c0_i32_1 = arith.constant 0 : i32
    return %arg0, %c0_i32, %c0_i32_0 : i32, i32, i32
  }
  func.func @transform_1(%arg0: i32) -> (i32, i32, i32) {
    %c0_i32 = arith.constant 0 : i32
    %c0_i32_0 = arith.constant 0 : i32
    %c0_i32_1 = arith.constant 0 : i32
    %c0_i32_2 = arith.constant 0 : i32
    return %c0_i32, %c0_i32_0, %c0_i32_1 : i32, i32, i32
  }
  func.func @transform_2(%arg0: i32) -> (i32, i32, i32) {
    %c0_i32 = arith.constant 0 : i32
    %c0_i32_0 = arith.constant 0 : i32
    %c0_i32_1 = arith.constant 0 : i32
    %c0_i32_2 = arith.constant 0 : i32
    return %c0_i32, %c0_i32_0, %c0_i32_1 : i32, i32, i32
  }
  func.func @transform_3(%arg0: i32) -> (i32, i32, i32) {
    %c0_i32 = arith.constant 0 : i32
    %c0_i32_0 = arith.constant 0 : i32
    %c0_i32_1 = arith.constant 0 : i32
    return %arg0, %c0_i32, %c0_i32_0 : i32, i32, i32
  }
}

</mosaic_0001>

<llo_original>
// kernel: _tcn_forward_impl.1
$region0: #{_tcn_forward_impl.1}
  #allocation0 [shape = 'u32[]', space=smem, size = 0x4, offset = 0x4, fixed_abs, tag = 'smem constant byte address 0x4 - core index']
  #allocation1 [shape = 'u32[144,128]{1,0:T(1,128)}', space=vmem, size = 0x12000, scoped, tag = 'internal scratch']
  #allocation2 [shape = 'bf16[24,128]{1,0:T(8,128)(2,1)}', space=vmem, size = 0x1800, scoped, tag = 'scratch operand']
  #allocation3 [shape = 'bf16[24,128]{1,0:T(8,128)(2,1)}', space=vmem, size = 0x1800, scoped, tag = 'scratch operand']
  %s0 = inlined_call_operand.vmem [shape: bf16[2,8,128], index: 0, kind: input, shape index: {}]
  %s1 = inlined_call_operand.hbm [shape: bf16[12,128,128], index: 1, kind: input, shape index: {}]
  %s2 = inlined_call_operand.vmem [shape: f32[4,1,128], index: 2, kind: input, shape index: {}]
  %s3 = inlined_call_operand.vmem [shape: bf16[2,8,128], index: 3, kind: output, shape index: {}]
  %s4 = sld [smem:[#allocation0]]
  $region49: #{_tcn_forward_impl.1} parent=0
    _
  %s6 = ssub.s32 1, %s4
  %s7 = scalar_select 0, %s6, %s4
  $region1: #{_tcn_forward_impl.1} parent=0
    #allocation4 [shape = 'u8[393216]{0}', space=vmem, size = 0x60000, scoped, tag = 'input window, operand 1, single buffered']
    #allocation5 [shape = 's32[2]{0}', space=sflag, size = 0x8, scoped, tag = 'scoped memory for _tcn_forward_impl.1']
    %8 = vsyncpa [#allocation5], 0
    loop: start=0, step=1, limit=4
    $region2: #{_tcn_forward_impl.1} parent=1 // loop_pre_header
      _
    $region3: #{_tcn_forward_impl.1} parent=1 // loop_header
      %s10 = sphi 0, %s14
      %p11 = scmp.ge.s32.totalorder %s10, 4
      %s20 = sphi 0, %s22
      %s23 = sphi 0, %s20
      %s24 = sphi 0, %s23
      %s40 = sphi 0, %s24
      %s44 = sphi 0, %s44
      %s46 = sphi 0, %s44
      %s47 = sphi 0, %s46
      %s61 = sphi 0, %s47
      %s65 = sphi 0, %s65
      %s67 = sphi 0, %s65
      %s68 = sphi 0, %s67
      %s82 = sphi 0, %s68
      %s88 = sphi 0, %s90
      %s91 = sphi 0, %s88
      %s92 = sphi 0, %s91
      %s108 = sphi 0, %s92
    $region4: #{_tcn_forward_impl.1} parent=1 // loop_header_branch
      %13 = sbr.rel (%p11) target = $region8
    $region5: #{_tcn_forward_impl.1} parent=1 // loop_body
      %s15 = ssub.s32 %s10, 1
      %s16 = ssub.s32 %s10, 2
      %s17 = sadd.s32 %s10, 1
      %s18 = ssub.s32 %s10, %s17
      %p19 = scmp.eq.s32.totalorder %s18, 0
      %s21 = sadd.s32 %s20, 1
      %s22 = scalar_select %p19, %s20, %s21
      %p25 = pneg %p19
      %p26 = scmp.eq.s32.totalorder %s10, 1
      %p27 = por %p25, %p26
      %p28 = scmp.ne.s32.totalorder %s20, %s23
      %p29 = scmp.eq.s32.totalorder %s10, 0
      %p30 = por %p28, %p29
      %p31 = scmp.ne.s32.totalorder %s20, %s23
      %p32 = scmp.eq.s32.totalorder %s15, 1
      %p33 = por %p31, %p32
      %p34 = scmp.ne.s32.totalorder %s23, %s24
      %p35 = scmp.eq.s32.totalorder %s15, 0
      %p36 = por %p34, %p35
      %p37 = scmp.ne.s32.totalorder %s23, %s24
      %p38 = scmp.eq.s32.totalorder %s16, 1
      %p39 = por %p37, %p38
      %p41 = scmp.ne.s32.totalorder %s24, %s40
      %p42 = scmp.eq.s32.totalorder %s16, 0
      %p43 = por %p41, %p42
      %s45 = sadd.s32 %s44, 1
      %p48 = scmp.eq.s32.totalorder %s10, 1
      %p49 = scmp.ne.s32.totalorder %s44, %s46
      %p50 = scmp.eq.s32.totalorder %s10, 0
      %p51 = por %p49, %p50
      %p52 = scmp.ne.s32.totalorder %s44, %s46
      %p53 = scmp.eq.s32.totalorder %s15, 1
      %p54 = por %p52, %p53
      %p55 = scmp.ne.s32.totalorder %s46, %s47
      %p56 = scmp.eq.s32.totalorder %s15, 0
      %p57 = por %p55, %p56
      %p58 = scmp.ne.s32.totalorder %s46, %s47
      %p59 = scmp.eq.s32.totalorder %s16, 1
      %p60 = por %p58, %p59
      %p62 = scmp.ne.s32.totalorder %s47, %s61
      %p63 = scmp.eq.s32.totalorder %s16, 0
      %p64 = por %p62, %p63
      %s66 = sadd.s32 %s65, 1
      %p69 = scmp.eq.s32.totalorder %s10, 1
      %p70 = scmp.ne.s32.totalorder %s65, %s67
      %p71 = scmp.eq.s32.totalorder %s10, 0
      %p72 = por %p70, %p71
      %p73 = scmp.ne.s32.totalorder %s65, %s67
      %p74 = scmp.eq.s32.totalorder %s15, 1
      %p75 = por %p73, %p74
      %p76 = scmp.ne.s32.totalorder %s67, %s68
      %p77 = scmp.eq.s32.totalorder %s15, 0
      %p78 = por %p76, %p77
      %p79 = scmp.ne.s32.totalorder %s67, %s68
      %p80 = scmp.eq.s32.totalorder %s16, 1
      %p81 = por %p79, %p80
      %p83 = scmp.ne.s32.totalorder %s68, %s82
      %p84 = scmp.eq.s32.totalorder %s16, 0
      %p85 = por %p83, %p84
      %s86 = ssub.s32 %s10, %s17
      %p87 = scmp.eq.s32.totalorder %s86, 0
      %s89 = sadd.s32 %s88, 1
      %s90 = scalar_select %p87, %s88, %s89
      %p93 = pneg %p87
      %p94 = scmp.eq.s32.totalorder %s10, 1
      %p95 = por %p93, %p94
      %p96 = scmp.ne.s32.totalorder %s88, %s91
      %p97 = scmp.eq.s32.totalorder %s10, 0
      %p98 = por %p96, %p97
      %p99 = scmp.ne.s32.totalorder %s88, %s91
      %p100 = scmp.eq.s32.totalorder %s15, 1
      %p101 = por %p99, %p100
      %p102 = scmp.ne.s32.totalorder %s91, %s92
      %p103 = scmp.eq.s32.totalorder %s15, 0
      %p104 = por %p102, %p103
      %p105 = scmp.ne.s32.totalorder %s91, %s92
      %p106 = scmp.eq.s32.totalorder %s16, 1
      %p107 = por %p105, %p106
      %p109 = scmp.ne.s32.totalorder %s92, %s108
      %p110 = scmp.eq.s32.totalorder %s16, 0
      %p111 = por %p109, %p110
      %p112 = scmp.le.s32.totalorder 1, %s10
      %p113 = scmp.lt.s32.totalorder %s10, 3
      %p114 = pnand %p112, %p113
      %p115 = pneg %p114
      // Predicated region
      $region9: #{_tcn_forward_impl.1} parent=5 // pred_check
        _
      $region10: #{_tcn_forward_impl.1} parent=5 // pred_check_branch
        %117 = sbr.rel (%p114) target = $region12
      $region11: #{_tcn_forward_impl.1} parent=5 // pred_region
        %s118 = ssub.s32 %s10, 1
        // Predicated region
        $region13: #{_tcn_forward_impl.1} parent=11 // pred_check
          %p119 = pneg %p57
        $region14: #{_tcn_forward_impl.1} parent=11 // pred_check_branch
          %121 = sbr.rel (%p119) target = $region16
        $region15: #{_tcn_forward_impl.1} parent=11 // pred_region
          %s123 = ssub.s32 12288, 12288
          %124 = vsyncadd [#allocation5], %s123
          %s125 = sshll.u32 [#allocation4], 4
          %s126 = int_to_ptr.vmem [resolvable:$true] %s125
          %131 = dma.hbm_to_vmem [thread:$0]  %s1, 12288, %s126, [#allocation5], 64, 64, 4
        $region16: #{_tcn_forward_impl.1} parent=11 // pred_fallthru
          _
        // Predicated region
        $region17: #{_tcn_forward_impl.1} parent=11 // pred_check
          %p132 = pneg %p78
        $region18: #{_tcn_forward_impl.1} parent=11 // pred_check_branch
          %134 = sbr.rel (%p132) target = $region20
        $region19: #{_tcn_forward_impl.1} parent=11 // pred_region
          _
        $region20: #{_tcn_forward_impl.1} parent=11 // pred_fallthru
          _
      $region12: #{_tcn_forward_impl.1} parent=5 // pred_fallthru
        _
      %p135 = scmp.lt.s32.totalorder %s10, 2
      // Predicated region
      $region21: #{_tcn_forward_impl.1} parent=5 // pred_check
        %p136 = pneg %p135
      $region22: #{_tcn_forward_impl.1} parent=5 // pred_check_branch
        %138 = sbr.rel (%p136) target = $region24
      $region23: #{_tcn_forward_impl.1} parent=5 // pred_region
        // Predicated region
        $region25: #{_tcn_forward_impl.1} parent=23 // pred_check
          %p139 = pneg %p30
        $region26: #{_tcn_forward_impl.1} parent=23 // pred_check_branch
          %141 = sbr.rel (%p139) target = $region28
        $region27: #{_tcn_forward_impl.1} parent=23 // pred_region
          %p142 = scmp.lt.s32.totalorder %s10, 1
          %s143 = scalar_select %p142, %s10, 1
          %s144 = smul.addr %s143, 4
          %s145 = scalar_lea.vmem %s0, %s144
        $region28: #{_tcn_forward_impl.1} parent=23 // pred_fallthru
          _
      $region24: #{_tcn_forward_impl.1} parent=5 // pred_fallthru
        _
      %p146 = scmp.le.s32.totalorder 1, %s10
      %p147 = scmp.lt.s32.totalorder %s10, 3
      %p148 = pnand %p146, %p147
      %p149 = pneg %p148
      // Predicated region
      $region29: #{_tcn_forward_impl.1} parent=5 // pred_check
        _
      $region30: #{_tcn_forward_impl.1} parent=5 // pred_check_branch
        %151 = sbr.rel (%p148) target = $region32
      $region31: #{_tcn_forward_impl.1} parent=5 // pred_region
        %s152 = ssub.s32 %s10, 1
        // Predicated region
        $region33: #{_tcn_forward_impl.1} parent=31 // pred_check
          %p153 = pneg %p57
        $region34: #{_tcn_forward_impl.1} parent=31 // pred_check_branch
          %155 = sbr.rel (%p153) target = $region36
        $region35: #{_tcn_forward_impl.1} parent=31 // pred_region
          %156 = dma.done [#allocation5], 12288
        $region36: #{_tcn_forward_impl.1} parent=31 // pred_fallthru
          _
        %p157 = scmp.lt.s32.totalorder %s15, 1
        %s158 = scalar_select %p157, %s15, 1
        %s159 = smul.addr %s158, 4
        %s160 = scalar_lea.vmem %s0, %s159
        %p161 = pneg %p36
        %p162 = pneg %p33
        %p163 = pneg %p57
        %p164 = pneg %p54
        %p165 = pneg %p78
        %p166 = pneg %p75
        %p167 = pneg %p104
        %p168 = pneg %p101
        %p169 = scmp.lt.s32.totalorder %s15, 1
        %s170 = scalar_select %p169, %s15, 1
        %s171 = smul.addr %s170, 4
        %s172 = scalar_lea.vmem %s3, %s171
        %p173 = scmp.lt.s32.totalorder %s15, 1
        %s174 = scalar_select %p173, %s15, 1
        %s175 = smul.addr %s174, 4
        %s176 = scalar_lea.vmem %s0, %s175
        %p177 = scmp.lt.s32.totalorder %s15, 1
        %s178 = scalar_select %p177, %s15, 1
        %s179 = smul.addr %s178, 4
        %s180 = scalar_lea.vmem %s3, %s179
        %182 = vst [vmem:[#allocation2] sm:$0xf] 0
        %183 = vst [vmem:[#allocation2 + $0x8] sm:$0xf] 0
        %184 = vst [vmem:[#allocation3] sm:$0xf] 0
        %185 = vst [vmem:[#allocation3 + $0x8] sm:$0xf] 0
        %v186 = vld [vmem:[%s176] sm:$0xf]
        %187 = vst [vmem:[#allocation2 + $0x4] sm:$0xf] %v186
        %v188 = vld [vmem:[#allocation2] sm:$0x8]
        %v189 = vld [vmem:[#allocation2 + $0x4] sm:$0xf]
        %v190 = vld [vmem:[#allocation4] sm:$0xf]
        %v191 = vld [vmem:[#allocation4 + $0x4] sm:$0xf]
        %v192 = vld [vmem:[#allocation4 + $0x8] sm:$0xf]
        %v193 = vld [vmem:[#allocation4 + $0xc] sm:$0xf]
        %v194 = vld [vmem:[#allocation4 + $0x10] sm:$0xf]
        %v195 = vld [vmem:[#allocation4 + $0x14] sm:$0xf]
        %v196 = vld [vmem:[#allocation4 + $0x18] sm:$0xf]
        %v197 = vld [vmem:[#allocation4 + $0x1c] sm:$0xf]
        %v198 = vld [vmem:[#allocation4 + $0x20] sm:$0xf]
        %v199 = vld [vmem:[#allocation4 + $0x24] sm:$0xf]
        %v200 = vld [vmem:[#allocation4 + $0x28] sm:$0xf]
        %v201 = vld [vmem:[#allocation4 + $0x2c] sm:$0xf]
        %v202 = vld [vmem:[#allocation4 + $0x30] sm:$0xf]
        %v203 = vld [vmem:[#allocation4 + $0x34] sm:$0xf]
        %v204 = vld [vmem:[#allocation4 + $0x38] sm:$0xf]
        %v205 = vld [vmem:[#allocation4 + $0x3c] sm:$0xf]
        %s206 = scalar_lea.vmem [#allocation4], 64
        %v207 = vld [vmem:[%s206] sm:$0xf]
        %v208 = vld [vmem:[%s206 + $0x4] sm:$0xf]
        %v209 = vld [vmem:[%s206 + $0x8] sm:$0xf]
        %v210 = vld [vmem:[%s206 + $0xc] sm:$0xf]
        %v211 = vld [vmem:[%s206 + $0x10] sm:$0xf]
        %v212 = vld [vmem:[%s206 + $0x14] sm:$0xf]
        %v213 = vld [vmem:[%s206 + $0x18] sm:$0xf]
        %v214 = vld [vmem:[%s206 + $0x1c] sm:$0xf]
        %v215 = vld [vmem:[%s206 + $0x20] sm:$0xf]
        %v216 = vld [vmem:[%s206 + $0x24] sm:$0xf]
        %v217 = vld [vmem:[%s206 + $0x28] sm:$0xf]
        %v218 = vld [vmem:[%s206 + $0x2c] sm:$0xf]
        %v219 = vld [vmem:[%s206 + $0x30] sm:$0xf]
        %v220 = vld [vmem:[%s206 + $0x34] sm:$0xf]
        %v221 = vld [vmem:[%s206 + $0x38] sm:$0xf]
        %v222 = vld [vmem:[%s206 + $0x3c] sm:$0xf]
        %v239 = vunpack.c.l.b16 %v207
        %v240 = vunpack.c.l.b16 %v208
        %v241 = vunpack.c.l.b16 %v209
        %v242 = vunpack.c.l.b16 %v210
        %v243 = vunpack.c.l.b16 %v211
        %v244 = vunpack.c.l.b16 %v212
        %v245 = vunpack.c.l.b16 %v213
        %v246 = vunpack.c.l.b16 %v214
        %v247 = vunpack.c.l.b16 %v215
        %v248 = vunpack.c.l.b16 %v216
        %v249 = vunpack.c.l.b16 %v217
        %v250 = vunpack.c.l.b16 %v218
        %v251 = vunpack.c.l.b16 %v219
        %v252 = vunpack.c.l.b16 %v220
        %v253 = vunpack.c.l.b16 %v221
        %v254 = vunpack.c.l.b16 %v222
        %v255 = vpack.c.b16 %v240, %v239
        %v256 = vpack.c.b16 %v242, %v241
        %v257 = vpack.c.b16 %v244, %v243
        %v258 = vpack.c.b16 %v246, %v245
        %v259 = vpack.c.b16 %v248, %v247
        %v260 = vpack.c.b16 %v250, %v249
        %v261 = vpack.c.b16 %v252, %v251
        %v262 = vpack.c.b16 %v254, %v253
        %271 = vmatprep.subr.bf16.mxu0 0
        %272 = vmatpush1.bf16.msra.mxu0 %v255
        %273 = vmatprep.subr.bf16.mxu0 0
        %274 = vmatpush1.bf16.msra.mxu0 %v256
        %275 = vmatprep.subr.bf16.mxu0 0
        %276 = vmatpush1.bf16.msra.mxu0 %v257
        %277 = vmatprep.subr.bf16.mxu0 0
        %278 = vmatpush1.bf16.msra.mxu0 %v258
        %279 = vmatprep.subr.bf16.mxu0 0
        %280 = vmatpush1.bf16.msra.mxu0 %v259
        %281 = vmatprep.subr.bf16.mxu0 0
        %282 = vmatpush1.bf16.msra.mxu0 %v260
        %283 = vmatprep.subr.bf16.mxu0 0
        %284 = vmatpush1.bf16.msra.mxu0 %v261
        %285 = vmatprep.subr.bf16.mxu0 0
        %286 = vmatpush1.bf16.msra.mxu0 %v262
        %287 = vmatprep.subr.bf16.mxu0 0
        %288 = vmatpush1.bf16.msra.mxu0 0
        %289 = vmatprep.subr.bf16.mxu0 0
        %290 = vmatpush1.bf16.msra.mxu0 0
        %291 = vmatprep.subr.bf16.mxu0 0
        %292 = vmatpush1.bf16.msra.mxu0 0
        %293 = vmatprep.subr.bf16.mxu0 0
        %294 = vmatpush1.bf16.msra.mxu0 0
        %295 = vmatprep.subr.bf16.mxu0 0
        %296 = vmatpush1.bf16.msra.mxu0 0
        %297 = vmatprep.subr.bf16.mxu0 0
        %298 = vmatpush1.bf16.msra.mxu0 0
        %299 = vmatprep.subr.bf16.mxu0 0
        %300 = vmatpush1.bf16.msra.mxu0 0
        %301 = vmatprep.subr.bf16.mxu0 0
        %302 = vmatpush1.bf16.msra.mxu0 0
        %303 = vmatprep.mubr.bf16.mxu0 0
        %304 = vmatmul.mubr.bf16.gmra.mrb[0].mxu0 %v189
        %v305 = vpop.f32.mrb[0].mxu0
        %v306 = vadd.f32 0.0, %v305
        %v307 = vpop.f32.mrb[0].mxu0
        %v308 = vpop.f32.mrb[0].mxu0
        %v309 = vpop.f32.mrb[0].mxu0
        %310 = vdwg.mxu0
        %v313 = vunpack.c.l.b16 %v188
        %v314 = vunpack.c.l.b16 %v189
        %v315 = vpack.c.b16 %v314, %v313
        %v317 = vshrl.u32 %v315, 16
        %v319 = vrot.slane %v317, 3
        %v320 = vshll.u32 %v315, 16
        %v322 = vrot.slane %v320, 4
        %v323 = vor.u32 %v319, %v322
        %v341 = vunpack.c.l.b16 %v190
        %v342 = vunpack.c.l.b16 %v191
        %v343 = vunpack.c.l.b16 %v192
        %v344 = vunpack.c.l.b16 %v193
        %v345 = vunpack.c.l.b16 %v194
        %v346 = vunpack.c.l.b16 %v195
        %v347 = vunpack.c.l.b16 %v196
        %v348 = vunpack.c.l.b16 %v197
        %v349 = vunpack.c.l.b16 %v198
        %v350 = vunpack.c.l.b16 %v199
        %v351 = vunpack.c.l.b16 %v200
        %v352 = vunpack.c.l.b16 %v201
        %v353 = vunpack.c.l.b16 %v202
        %v354 = vunpack.c.l.b16 %v203
        %v355 = vunpack.c.l.b16 %v204
        %v356 = vunpack.c.l.b16 %v205
        %v357 = vpack.c.b16 %v342, %v341
        %v358 = vpack.c.b16 %v344, %v343
        %v359 = vpack.c.b16 %v346, %v345
        %v360 = vpack.c.b16 %v348, %v347
        %v361 = vpack.c.b16 %v350, %v349
        %v362 = vpack.c.b16 %v352, %v351
        %v363 = vpack.c.b16 %v354, %v353
        %v364 = vpack.c.b16 %v356, %v355
        %373 = vmatprep.subr.bf16.mxu0 0
        %374 = vmatpush1.bf16.msra.mxu0 %v357
        %375 = vmatprep.subr.bf16.mxu0 0
        %376 = vmatpush1.bf16.msra.mxu0 %v358
        %377 = vmatprep.subr.bf16.mxu0 0
        %378 = vmatpush1.bf16.msra.mxu0 %v359
        %379 = vmatprep.subr.bf16.mxu0 0
        %380 = vmatpush1.bf16.msra.mxu0 %v360
        %381 = vmatprep.subr.bf16.mxu0 0
        %382 = vmatpush1.bf16.msra.mxu0 %v361
        %383 = vmatprep.subr.bf16.mxu0 0
        %384 = vmatpush1.bf16.msra.mxu0 %v362
        %385 = vmatprep.subr.bf16.mxu0 0
        %386 = vmatpush1.bf16.msra.mxu0 %v363
        %387 = vmatprep.subr.bf16.mxu0 0
        %388 = vmatpush1.bf16.msra.mxu0 %v364
        %389 = vmatprep.subr.bf16.mxu0 0
        %390 = vmatpush1.bf16.msra.mxu0 0
        %391 = vmatprep.subr.bf16.mxu0 0
        %392 = vmatpush1.bf16.msra.mxu0 0
        %393 = vmatprep.subr.bf16.mxu0 0
        %394 = vmatpush1.bf16.msra.mxu0 0
        %395 = vmatprep.subr.bf16.mxu0 0
        %396 = vmatpush1.bf16.msra.mxu0 0
        %397 = vmatprep.subr.bf16.mxu0 0
        %398 = vmatpush1.bf16.msra.mxu0 0
        %399 = vmatprep.subr.bf16.mxu0 0
        %400 = vmatpush1.bf16.msra.mxu0 0
        %401 = vmatprep.subr.bf16.mxu0 0
        %402 = vmatpush1.bf16.msra.mxu0 0
        %403 = vmatprep.subr.bf16.mxu0 0
        %404 = vmatpush1.bf16.msra.mxu0 0
        %405 = vmatprep.mubr.bf16.mxu0 0
        %406 = vmatmul.mubr.bf16.gmra.mrb[0].mxu0 %v323
        %v407 = vpop.f32.mrb[0].mxu0
        %v408 = vadd.f32 %v306, %v407
        %v409 = vpop.f32.mrb[0].mxu0
        %v410 = vpop.f32.mrb[0].mxu0
        %v411 = vpop.f32.mrb[0].mxu0
        %412 = vdwg.mxu0
        %v413 = vld [vmem:[#allocation2 + $0x4] sm:$0xf]
        %v414 = vld [vmem:[#allocation2 + $0x8] sm:$0x1]
        %s415 = scalar_lea.vmem [#allocation4], 128
        %v416 = vld [vmem:[%s415] sm:$0xf]
        %v417 = vld [vmem:[%s415 + $0x4] sm:$0xf]
        %v418 = vld [vmem:[%s415 + $0x8] sm:$0xf]
        %v419 = vld [vmem:[%s415 + $0xc] sm:$0xf]
        %v420 = vld [vmem:[%s415 + $0x10] sm:$0xf]
        %v421 = vld [vmem:[%s415 + $0x14] sm:$0xf]
        %v422 = vld [vmem:[%s415 + $0x18] sm:$0xf]
        %v423 = vld [vmem:[%s415 + $0x1c] sm:$0xf]
        %v424 = vld [vmem:[%s415 + $0x20] sm:$0xf]
        %v425 = vld [vmem:[%s415 + $0x24] sm:$0xf]
        %v426 = vld [vmem:[%s415 + $0x28] sm:$0xf]
        %v427 = vld [vmem:[%s415 + $0x2c] sm:$0xf]
        %v428 = vld [vmem:[%s415 + $0x30] sm:$0xf]
        %v429 = vld [vmem:[%s415 + $0x34] sm:$0xf]
        %v430 = vld [vmem:[%s415 + $0x38] sm:$0xf]
        %v431 = vld [vmem:[%s415 + $0x3c] sm:$0xf]
        %v434 = vunpack.c.l.b16 %v413
        %v435 = vunpack.c.l.b16 %v414
        %v436 = vpack.c.b16 %v435, %v434
        %v438 = vshrl.u32 %v436, 16
        %v440 = vshll.u32 %v436, 16
        %v442 = vrot.slane %v440, 1
        %v443 = vor.u32 %v438, %v442
        %v461 = vunpack.c.l.b16 %v416
        %v462 = vunpack.c.l.b16 %v417
        %v463 = vunpack.c.l.b16 %v418
        %v464 = vunpack.c.l.b16 %v419
        %v465 = vunpack.c.l.b16 %v420
        %v466 = vunpack.c.l.b16 %v421
        %v467 = vunpack.c.l.b16 %v422
        %v468 = vunpack.c.l.b16 %v423
        %v469 = vunpack.c.l.b16 %v424
        %v470 = vunpack.c.l.b16 %v425
        %v471 = vunpack.c.l.b16 %v426
        %v472 = vunpack.c.l.b16 %v427
        %v473 = vunpack.c.l.b16 %v428
        %v474 = vunpack.c.l.b16 %v429
        %v475 = vunpack.c.l.b16 %v430
        %v476 = vunpack.c.l.b16 %v431
        %v477 = vpack.c.b16 %v462, %v461
        %v478 = vpack.c.b16 %v464, %v463
        %v479 = vpack.c.b16 %v466, %v465
        %v480 = vpack.c.b16 %v468, %v467
        %v481 = vpack.c.b16 %v470, %v469
        %v482 = vpack.c.b16 %v472, %v471
        %v483 = vpack.c.b16 %v474, %v473
        %v484 = vpack.c.b16 %v476, %v475
        %493 = vmatprep.subr.bf16.mxu0 0
        %494 = vmatpush1.bf16.msra.mxu0 %v477
        %495 = vmatprep.subr.bf16.mxu0 0
        %496 = vmatpush1.bf16.msra.mxu0 %v478
        %497 = vmatprep.subr.bf16.mxu0 0
        %498 = vmatpush1.bf16.msra.mxu0 %v479
        %499 = vmatprep.subr.bf16.mxu0 0
        %500 = vmatpush1.bf16.msra.mxu0 %v480
        %501 = vmatprep.subr.bf16.mxu0 0
        %502 = vmatpush1.bf16.msra.mxu0 %v481
        %503 = vmatprep.subr.bf16.mxu0 0
        %504 = vmatpush1.bf16.msra.mxu0 %v482
        %505 = vmatprep.subr.bf16.mxu0 0
        %506 = vmatpush1.bf16.msra.mxu0 %v483
        %507 = vmatprep.subr.bf16.mxu0 0
        %508 = vmatpush1.bf16.msra.mxu0 %v484
        %509 = vmatprep.subr.bf16.mxu0 0
        %510 = vmatpush1.bf16.msra.mxu0 0
        %511 = vmatprep.subr.bf16.mxu0 0
        %512 = vmatpush1.bf16.msra.mxu0 0
        %513 = vmatprep.subr.bf16.mxu0 0
        %514 = vmatpush1.bf16.msra.mxu0 0
        %515 = vmatprep.subr.bf16.mxu0 0
        %516 = vmatpush1.bf16.msra.mxu0 0
        %517 = vmatprep.subr.bf16.mxu0 0
        %518 = vmatpush1.bf16.msra.mxu0 0
        %519 = vmatprep.subr.bf16.mxu0 0
        %520 = vmatpush1.bf16.msra.mxu0 0
        %521 = vmatprep.subr.bf16.mxu0 0
        %522 = vmatpush1.bf16.msra.mxu0 0
        %523 = vmatprep.subr.bf16.mxu0 0
        %524 = vmatpush1.bf16.msra.mxu0 0
        %525 = vmatprep.mubr.bf16.mxu0 0
        %526 = vmatmul.mubr.bf16.gmra.mrb[0].mxu0 %v443
        %v527 = vpop.f32.mrb[0].mxu0
        %v528 = vadd.f32 0.0, %v527
        %v529 = vpop.f32.mrb[0].mxu0
        %v530 = vpop.f32.mrb[0].mxu0
        %v531 = vpop.f32.mrb[0].mxu0
        %532 = vdwg.mxu0
        %v533 = vadd.f32 %v408, %v528
        %v534 = vld [vmem:[%s2] sm:$0x1]
        %v536 = vlaneseq
        %v537 = vshrl.u32 %v536, 7
        %v538 = vsub.s32 0, %v537
        %v539 = vrot.slane %v534, %v538
        %v541 = vadd.f32 %v533, %v539
        %v542 = vmax.f32 %v541, 0.0
        %v543 = vpack.c.bf16 %v542, %v542
        %544 = vst [vmem:[#allocation3 + $0x4] sm:$0xf] %v543
        %v545 = vld [vmem:[#allocation3] sm:$0x8]
        %v546 = vld [vmem:[#allocation3 + $0x4] sm:$0xf]
        %s547 = scalar_lea.vmem [#allocation4], 192
        %v548 = vld [vmem:[%s547] sm:$0xf]
        %v549 = vld [vmem:[%s547 + $0x4] sm:$0xf]
        %v550 = vld [vmem:[%s547 + $0x8] sm:$0xf]
        %v551 = vld [vmem:[%s547 + $0xc] sm:$0xf]
        %v552 = vld [vmem:[%s547 + $0x10] sm:$0xf]
        %v553 = vld [vmem:[%s547 + $0x14] sm:$0xf]
        %v554 = vld [vmem:[%s547 + $0x18] sm:$0xf]
        %v555 = vld [vmem:[%s547 + $0x1c] sm:$0xf]
        %v556 = vld [vmem:[%s547 + $0x20] sm:$0xf]
        %v557 = vld [vmem:[%s547 + $0x24] sm:$0xf]
        %v558 = vld [vmem:[%s547 + $0x28] sm:$0xf]
        %v559 = vld [vmem:[%s547 + $0x2c] sm:$0xf]
        %v560 = vld [vmem:[%s547 + $0x30] sm:$0xf]
        %v561 = vld [vmem:[%s547 + $0x34] sm:$0xf]
        %v562 = vld [vmem:[%s547 + $0x38] sm:$0xf]
        %v563 = vld [vmem:[%s547 + $0x3c] sm:$0xf]
        %s564 = scalar_lea.vmem [#allocation4], 256
        %v565 = vld [vmem:[%s564] sm:$0xf]
        %v566 = vld [vmem:[%s564 + $0x4] sm:$0xf]
        %v567 = vld [vmem:[%s564 + $0x8] sm:$0xf]
        %v568 = vld [vmem:[%s564 + $0xc] sm:$0xf]
        %v569 = vld [vmem:[%s564 + $0x10] sm:$0xf]
        %v570 = vld [vmem:[%s564 + $0x14] sm:$0xf]
        %v571 = vld [vmem:[%s564 + $0x18] sm:$0xf]
        %v572 = vld [vmem:[%s564 + $0x1c] sm:$0xf]
        %v573 = vld [vmem:[%s564 + $0x20] sm:$0xf]
        %v574 = vld [vmem:[%s564 + $0x24] sm:$0xf]
        %v575 = vld [vmem:[%s564 + $0x28] sm:$0xf]
        %v576 = vld [vmem:[%s564 + $0x2c] sm:$0xf]
        %v577 = vld [vmem:[%s564 + $0x30] sm:$0xf]
        %v578 = vld [vmem:[%s564 + $0x34] sm:$0xf]
        %v579 = vld [vmem:[%s564 + $0x38] sm:$0xf]
        %v580 = vld [vmem:[%s564 + $0x3c] sm:$0xf]
        %v597 = vunpack.c.l.b16 %v565
        %v598 = vunpack.c.l.b16 %v566
        %v599 = vunpack.c.l.b16 %v567
        %v600 = vunpack.c.l.b16 %v568
        %v601 = vunpack.c.l.b16 %v569
        %v602 = vunpack.c.l.b16 %v570
        %v603 = vunpack.c.l.b16 %v571
        %v604 = vunpack.c.l.b16 %v572
        %v605 = vunpack.c.l.b16 %v573
        %v606 = vunpack.c.l.b16 %v574
        %v607 = vunpack.c.l.b16 %v575
        %v608 = vunpack.c.l.b16 %v576
        %v609 = vunpack.c.l.b16 %v577
        %v610 = vunpack.c.l.b16 %v578
        %v611 = vunpack.c.l.b16 %v579
        %v612 = vunpack.c.l.b16 %v580
        %v613 = vpack.c.b16 %v598, %v597
        %v614 = vpack.c.b16 %v600, %v599
        %v615 = vpack.c.b16 %v602, %v601
        %v616 = vpack.c.b16 %v604, %v603
        %v617 = vpack.c.b16 %v606, %v605
        %v618 = vpack.c.b16 %v608, %v607
        %v619 = vpack.c.b16 %v610, %v609
        %v620 = vpack.c.b16 %v612, %v611
        %629 = vmatprep.subr.bf16.mxu0 0
        %630 = vmatpush1.bf16.msra.mxu0 %v613
        %631 = vmatprep.subr.bf16.mxu0 0
        %632 = vmatpush1.bf16.msra.mxu0 %v614
        %633 = vmatprep.subr.bf16.mxu0 0
        %634 = vmatpush1.bf16.msra.mxu0 %v615
        %635 = vmatprep.subr.bf16.mxu0 0
        %636 = vmatpush1.bf16.msra.mxu0 %v616
        %637 = vmatprep.subr.bf16.mxu0 0
        %638 = vmatpush1.bf16.msra.mxu0 %v617
        %639 = vmatprep.subr.bf16.mxu0 0
        %640 = vmatpush1.bf16.msra.mxu0 %v618
        %641 = vmatprep.subr.bf16.mxu0 0
        %642 = vmatpush1.bf16.msra.mxu0 %v619
        %643 = vmatprep.subr.bf16.mxu0 0
        %644 = vmatpush1.bf16.msra.mxu0 %v620
        %645 = vmatprep.subr.bf16.mxu0 0
        %646 = vmatpush1.bf16.msra.mxu0 0
        %647 = vmatprep.subr.bf16.mxu0 0
        %648 = vmatpush1.bf16.msra.mxu0 0
        %649 = vmatprep.subr.bf16.mxu0 0
        %650 = vmatpush1.bf16.msra.mxu0 0
        %651 = vmatprep.subr.bf16.mxu0 0
        %652 = vmatpush1.bf16.msra.mxu0 0
        %653 = vmatprep.subr.bf16.mxu0 0
        %654 = vmatpush1.bf16.msra.mxu0 0
        %655 = vmatprep.subr.bf16.mxu0 0
        %656 = vmatpush1.bf16.msra.mxu0 0
        %657 = vmatprep.subr.bf16.mxu0 0
        %658 = vmatpush1.bf16.msra.mxu0 0
        %659 = vmatprep.subr.bf16.mxu0 0
        %660 = vmatpush1.bf16.msra.mxu0 0
        %661 = vmatprep.mubr.bf16.mxu0 0
        %662 = vmatmul.mubr.bf16.gmra.mrb[0].mxu0 %v546
        %v663 = vpop.f32.mrb[0].mxu0
        %v664 = vadd.f32 0.0, %v663
        %v665 = vpop.f32.mrb[0].mxu0
        %v666 = vpop.f32.mrb[0].mxu0
        %v667 = vpop.f32.mrb[0].mxu0
        %668 = vdwg.mxu0
        %v671 = vunpack.c.l.b16 %v545
        %v672 = vunpack.c.l.b16 %v546
        %v673 = vpack.c.b16 %v672, %v671
        %v675 = vshrl.u32 %v673, 16
        %v677 = vrot.slane %v675, 3
        %v678 = vshll.u32 %v673, 16
        %v680 = vrot.slane %v678, 4
        %v681 = vor.u32 %v677, %v680
        %v699 = vunpack.c.l.b16 %v548
        %v700 = vunpack.c.l.b16 %v549
        %v701 = vunpack.c.l.b16 %v550
        %v702 = vunpack.c.l.b16 %v551
        %v703 = vunpack.c.l.b16 %v552
        %v704 = vunpack.c.l.b16 %v553
        %v705 = vunpack.c.l.b16 %v554
        %v706 = vunpack.c.l.b16 %v555
        %v707 = vunpack.c.l.b16 %v556
        %v708 = vunpack.c.l.b16 %v557
        %v709 = vunpack.c.l.b16 %v558
        %v710 = vunpack.c.l.b16 %v559
        %v711 = vunpack.c.l.b16 %v560
        %v712 = vunpack.c.l.b16 %v561
        %v713 = vunpack.c.l.b16 %v562
        %v714 = vunpack.c.l.b16 %v563
        %v715 = vpack.c.b16 %v700, %v699
        %v716 = vpack.c.b16 %v702, %v701
        %v717 = vpack.c.b16 %v704, %v703
        %v718 = vpack.c.b16 %v706, %v705
        %v719 = vpack.c.b16 %v708, %v707
        %v720 = vpack.c.b16 %v710, %v709
        %v721 = vpack.c.b16 %v712, %v711
        %v722 = vpack.c.b16 %v714, %v713
        %731 = vmatprep.subr.bf16.mxu0 0
        %732 = vmatpush1.bf16.msra.mxu0 %v715
        %733 = vmatprep.subr.bf16.mxu0 0
        %734 = vmatpush1.bf16.msra.mxu0 %v716
        %735 = vmatprep.subr.bf16.mxu0 0
        %736 = vmatpush1.bf16.msra.mxu0 %v717
        %737 = vmatprep.subr.bf16.mxu0 0
        %738 = vmatpush1.bf16.msra.mxu0 %v718
        %739 = vmatprep.subr.bf16.mxu0 0
        %740 = vmatpush1.bf16.msra.mxu0 %v719
        %741 = vmatprep.subr.bf16.mxu0 0
        %742 = vmatpush1.bf16.msra.mxu0 %v720
        %743 = vmatprep.subr.bf16.mxu0 0
        %744 = vmatpush1.bf16.msra.mxu0 %v721
        %745 = vmatprep.subr.bf16.mxu0 0
        %746 = vmatpush1.bf16.msra.mxu0 %v722
        %747 = vmatprep.subr.bf16.mxu0 0
        %748 = vmatpush1.bf16.msra.mxu0 0
        %749 = vmatprep.subr.bf16.mxu0 0
        %750 = vmatpush1.bf16.msra.mxu0 0
        %751 = vmatprep.subr.bf16.mxu0 0
        %752 = vmatpush1.bf16.msra.mxu0 0
        %753 = vmatprep.subr.bf16.mxu0 0
        %754 = vmatpush1.bf16.msra.mxu0 0
        %755 = vmatprep.subr.bf16.mxu0 0
        %756 = vmatpush1.bf16.msra.mxu0 0
        %757 = vmatprep.subr.bf16.mxu0 0
        %758 = vmatpush1.bf16.msra.mxu0 0
        %759 = vmatprep.subr.bf16.mxu0 0
        %760 = vmatpush1.bf16.msra.mxu0 0
        %761 = vmatprep.subr.bf16.mxu0 0
        %762 = vmatpush1.bf16.msra.mxu0 0
        %763 = vmatprep.mubr.bf16.mxu0 0
        %764 = vmatmul.mubr.bf16.gmra.mrb[0].mxu0 %v681
        %v765 = vpop.f32.mrb[0].mxu0
        %v766 = vadd.f32 %v664, %v765
        %v767 = vpop.f32.mrb[0].mxu0
        %v768 = vpop.f32.mrb[0].mxu0
        %v769 = vpop.f32.mrb[0].mxu0
        %770 = vdwg.mxu0
        %v771 = vld [vmem:[#allocation3 + $0x4] sm:$0xf]
        %v772 = vld [vmem:[#allocation3 + $0x8] sm:$0x1]
        %s773 = scalar_lea.vmem [#allocation4], 320
        %v774 = vld [vmem:[%s773] sm:$0xf]
        %v775 = vld [vmem:[%s773 + $0x4] sm:$0xf]
        %v776 = vld [vmem:[%s773 + $0x8] sm:$0xf]
        %v777 = vld [vmem:[%s773 + $0xc] sm:$0xf]
        %v778 = vld [vmem:[%s773 + $0x10] sm:$0xf]
        %v779 = vld [vmem:[%s773 + $0x14] sm:$0xf]
        %v780 = vld [vmem:[%s773 + $0x18] sm:$0xf]
        %v781 = vld [vmem:[%s773 + $0x1c] sm:$0xf]
        %v782 = vld [vmem:[%s773 + $0x20] sm:$0xf]
        %v783 = vld [vmem:[%s773 + $0x24] sm:$0xf]
        %v784 = vld [vmem:[%s773 + $0x28] sm:$0xf]
        %v785 = vld [vmem:[%s773 + $0x2c] sm:$0xf]
        %v786 = vld [vmem:[%s773 + $0x30] sm:$0xf]
        %v787 = vld [vmem:[%s773 + $0x34] sm:$0xf]
        %v788 = vld [vmem:[%s773 + $0x38] sm:$0xf]
        %v789 = vld [vmem:[%s773 + $0x3c] sm:$0xf]
        %v792 = vunpack.c.l.b16 %v771
        %v793 = vunpack.c.l.b16 %v772
        %v794 = vpack.c.b16 %v793, %v792
        %v796 = vshrl.u32 %v794, 16
        %v798 = vshll.u32 %v794, 16
        %v800 = vrot.slane %v798, 1
        %v801 = vor.u32 %v796, %v800
        %v819 = vunpack.c.l.b16 %v774
        %v820 = vunpack.c.l.b16 %v775
        %v821 = vunpack.c.l.b16 %v776
        %v822 = vunpack.c.l.b16 %v777
        %v823 = vunpack.c.l.b16 %v778
        %v824 = vunpack.c.l.b16 %v779
        %v825 = vunpack.c.l.b16 %v780
        %v826 = vunpack.c.l.b16 %v781
        %v827 = vunpack.c.l.b16 %v782
        %v828 = vunpack.c.l.b16 %v783
        %v829 = vunpack.c.l.b16 %v784
        %v830 = vunpack.c.l.b16 %v785
        %v831 = vunpack.c.l.b16 %v786
        %v832 = vunpack.c.l.b16 %v787
        %v833 = vunpack.c.l.b16 %v788
        %v834 = vunpack.c.l.b16 %v789
        %v835 = vpack.c.b16 %v820, %v819
        %v836 = vpack.c.b16 %v822, %v821
        %v837 = vpack.c.b16 %v824, %v823
        %v838 = vpack.c.b16 %v826, %v825
        %v839 = vpack.c.b16 %v828, %v827
        %v840 = vpack.c.b16 %v830, %v829
        %v841 = vpack.c.b16 %v832, %v831
        %v842 = vpack.c.b16 %v834, %v833
        %851 = vmatprep.subr.bf16.mxu0 0
        %852 = vmatpush1.bf16.msra.mxu0 %v835
        %853 = vmatprep.subr.bf16.mxu0 0
        %854 = vmatpush1.bf16.msra.mxu0 %v836
        %855 = vmatprep.subr.bf16.mxu0 0
        %856 = vmatpush1.bf16.msra.mxu0 %v837
        %857 = vmatprep.subr.bf16.mxu0 0
        %858 = vmatpush1.bf16.msra.mxu0 %v838
        %859 = vmatprep.subr.bf16.mxu0 0
        %860 = vmatpush1.bf16.msra.mxu0 %v839
        %861 = vmatprep.subr.bf16.mxu0 0
        %862 = vmatpush1.bf16.msra.mxu0 %v840
        %863 = vmatprep.subr.bf16.mxu0 0
        %864 = vmatpush1.bf16.msra.mxu0 %v841
        %865 = vmatprep.subr.bf16.mxu0 0
        %866 = vmatpush1.bf16.msra.mxu0 %v842
        %867 = vmatprep.subr.bf16.mxu0 0
        %868 = vmatpush1.bf16.msra.mxu0 0
        %869 = vmatprep.subr.bf16.mxu0 0
        %870 = vmatpush1.bf16.msra.mxu0 0
        %871 = vmatprep.subr.bf16.mxu0 0
        %872 = vmatpush1.bf16.msra.mxu0 0
        %873 = vmatprep.subr.bf16.mxu0 0
        %874 = vmatpush1.bf16.msra.mxu0 0
        %875 = vmatprep.subr.bf16.mxu0 0
        %876 = vmatpush1.bf16.msra.mxu0 0
        %877 = vmatprep.subr.bf16.mxu0 0
        %878 = vmatpush1.bf16.msra.mxu0 0
        %879 = vmatprep.subr.bf16.mxu0 0
        %880 = vmatpush1.bf16.msra.mxu0 0
        %881 = vmatprep.subr.bf16.mxu0 0
        %882 = vmatpush1.bf16.msra.mxu0 0
        %883 = vmatprep.mubr.bf16.mxu0 0
        %884 = vmatmul.mubr.bf16.gmra.mrb[0].mxu0 %v801
        %v885 = vpop.f32.mrb[0].mxu0
        %v886 = vadd.f32 0.0, %v885
        %v887 = vpop.f32.mrb[0].mxu0
        %v888 = vpop.f32.mrb[0].mxu0
        %v889 = vpop.f32.mrb[0].mxu0
        %890 = vdwg.mxu0
        %v891 = vadd.f32 %v766, %v886
        %s892 = scalar_lea.vmem %s2, 1
        %v893 = vld [vmem:[%s892] sm:$0x1]
        %v895 = vlaneseq
        %v896 = vshrl.u32 %v895, 7
        %v897 = vsub.s32 0, %v896
        %v898 = vrot.slane %v893, %v897
        %v900 = vadd.f32 %v891, %v898
        %v901 = vmax.f32 %v900, 0.0
        %v902 = vpack.c.bf16 %v901, %v901
        %903 = vst [vmem:[#allocation2 + $0x4] sm:$0xf] %v902
        %v904 = vld [vmem:[#allocation2] sm:$0x8]
        %v905 = vld [vmem:[#allocation2 + $0x4] sm:$0x7]
        %s906 = scalar_lea.vmem [#allocation4], 384
        %v907 = vld [vmem:[%s906] sm:$0xf]
        %v908 = vld [vmem:[%s906 + $0x4] sm:$0xf]
        %v909 = vld [vmem:[%s906 + $0x8] sm:$0xf]
        %v910 = vld [vmem:[%s906 + $0xc] sm:$0xf]
        %v911 = vld [vmem:[%s906 + $0x10] sm:$0xf]
        %v912 = vld [vmem:[%s906 + $0x14] sm:$0xf]
        %v913 = vld [vmem:[%s906 + $0x18] sm:$0xf]
        %v914 = vld [vmem:[%s906 + $0x1c] sm:$0xf]
        %v915 = vld [vmem:[%s906 + $0x20] sm:$0xf]
        %v916 = vld [vmem:[%s906 + $0x24] sm:$0xf]
        %v917 = vld [vmem:[%s906 + $0x28] sm:$0xf]
        %v918 = vld [vmem:[%s906 + $0x2c] sm:$0xf]
        %v919 = vld [vmem:[%s906 + $0x30] sm:$0xf]
        %v920 = vld [vmem:[%s906 + $0x34] sm:$0xf]
        %v921 = vld [vmem:[%s906 + $0x38] sm:$0xf]
        %v922 = vld [vmem:[%s906 + $0x3c] sm:$0xf]
        %v923 = vld [vmem:[#allocation2 + $0x4] sm:$0xf]
        %s924 = scalar_lea.vmem [#allocation4], 448
        %v925 = vld [vmem:[%s924] sm:$0xf]
        %v926 = vld [vmem:[%s924 + $0x4] sm:$0xf]
        %v927 = vld [vmem:[%s924 + $0x8] sm:$0xf]
        %v928 = vld [vmem:[%s924 + $0xc] sm:$0xf]
        %v929 = vld [vmem:[%s924 + $0x10] sm:$0xf]
        %v930 = vld [vmem:[%s924 + $0x14] sm:$0xf]
        %v931 = vld [vmem:[%s924 + $0x18] sm:$0xf]
        %v932 = vld [vmem:[%s924 + $0x1c] sm:$0xf]
        %v933 = vld [vmem:[%s924 + $0x20] sm:$0xf]
        %v934 = vld [vmem:[%s924 + $0x24] sm:$0xf]
        %v935 = vld [vmem:[%s924 + $0x28] sm:$0xf]
        %v936 = vld [vmem:[%s924 + $0x2c] sm:$0xf]
        %v937 = vld [vmem:[%s924 + $0x30] sm:$0xf]
        %v938 = vld [vmem:[%s924 + $0x34] sm:$0xf]
        %v939 = vld [vmem:[%s924 + $0x38] sm:$0xf]
        %v940 = vld [vmem:[%s924 + $0x3c] sm:$0xf]
        %v957 = vunpack.c.l.b16 %v925
        %v958 = vunpack.c.l.b16 %v926
        %v959 = vunpack.c.l.b16 %v927
        %v960 = vunpack.c.l.b16 %v928
        %v961 = vunpack.c.l.b16 %v929
        %v962 = vunpack.c.l.b16 %v930
        %v963 = vunpack.c.l.b16 %v931
        %v964 = vunpack.c.l.b16 %v932
        %v965 = vunpack.c.l.b16 %v933
        %v966 = vunpack.c.l.b16 %v934
        %v967 = vunpack.c.l.b16 %v935
        %v968 = vunpack.c.l.b16 %v936
        %v969 = vunpack.c.l.b16 %v937
        %v970 = vunpack.c.l.b16 %v938
        %v971 = vunpack.c.l.b16 %v939
        %v972 = vunpack.c.l.b16 %v940
        %v973 = vpack.c.b16 %v958, %v957
        %v974 = vpack.c.b16 %v960, %v959
        %v975 = vpack.c.b16 %v962, %v961
        %v976 = vpack.c.b16 %v964, %v963
        %v977 = vpack.c.b16 %v966, %v965
        %v978 = vpack.c.b16 %v968, %v967
        %v979 = vpack.c.b16 %v970, %v969
        %v980 = vpack.c.b16 %v972, %v971
        %989 = vmatprep.subr.bf16.mxu0 0
        %990 = vmatpush1.bf16.msra.mxu0 %v973
        %991 = vmatprep.subr.bf16.mxu0 0
        %992 = vmatpush1.bf16.msra.mxu0 %v974
        %993 = vmatprep.subr.bf16.mxu0 0
        %994 = vmatpush1.bf16.msra.mxu0 %v975
        %995 = vmatprep.subr.bf16.mxu0 0
        %996 = vmatpush1.bf16.msra.mxu0 %v976
        %997 = vmatprep.subr.bf16.mxu0 0
        %998 = vmatpush1.bf16.msra.mxu0 %v977
        %999 = vmatprep.subr.bf16.mxu0 0
        %1000 = vmatpush1.bf16.msra.mxu0 %v978
        %1001 = vmatprep.subr.bf16.mxu0 0
        %1002 = vmatpush1.bf16.msra.mxu0 %v979
        %1003 = vmatprep.subr.bf16.mxu0 0
        %1004 = vmatpush1.bf16.msra.mxu0 %v980
        %1005 = vmatprep.subr.bf16.mxu0 0
        %1006 = vmatpush1.bf16.msra.mxu0 0
        %1007 = vmatprep.subr.bf16.mxu0 0
        %1008 = vmatpush1.bf16.msra.mxu0 0
        %1009 = vmatprep.subr.bf16.mxu0 0
        %1010 = vmatpush1.bf16.msra.mxu0 0
        %1011 = vmatprep.subr.bf16.mxu0 0
        %1012 = vmatpush1.bf16.msra.mxu0 0
        %1013 = vmatprep.subr.bf16.mxu0 0
        %1014 = vmatpush1.bf16.msra.mxu0 0
        %1015 = vmatprep.subr.bf16.mxu0 0
        %1016 = vmatpush1.bf16.msra.mxu0 0
        %1017 = vmatprep.subr.bf16.mxu0 0
        %1018 = vmatpush1.bf16.msra.mxu0 0
        %1019 = vmatprep.subr.bf16.mxu0 0
        %1020 = vmatpush1.bf16.msra.mxu0 0
        %1021 = vmatprep.mubr.bf16.mxu0 0
        %1022 = vmatmul.mubr.bf16.gmra.mrb[0].mxu0 %v923
        %v1023 = vpop.f32.mrb[0].mxu0
        %v1024 = vadd.f32 0.0, %v1023
        %v1025 = vpop.f32.mrb[0].mxu0
        %v1026 = vpop.f32.mrb[0].mxu0
        %v1027 = vpop.f32.mrb[0].mxu0
        %1028 = vdwg.mxu0
        %v1031 = vunpack.c.l.b16 %v904
        %v1032 = vunpack.c.l.b16 %v905
        %v1033 = vpack.c.b16 %v1032, %v1031
        %v1034 = vrot.slane %v1033, 3
        %v1052 = vunpack.c.l.b16 %v907
        %v1053 = vunpack.c.l.b16 %v908
        %v1054 = vunpack.c.l.b16 %v909
        %v1055 = vunpack.c.l.b16 %v910
        %v1056 = vunpack.c.l.b16 %v911
        %v1057 = vunpack.c.l.b16 %v912
        %v1058 = vunpack.c.l.b16 %v913
        %v1059 = vunpack.c.l.b16 %v914
        %v1060 = vunpack.c.l.b16 %v915
        %v1061 = vunpack.c.l.b16 %v916
        %v1062 = vunpack.c.l.b16 %v917
        %v1063 = vunpack.c.l.b16 %v918
        %v1064 = vunpack.c.l.b16 %v919
        %v1065 = vunpack.c.l.b16 %v920
        %v1066 = vunpack.c.l.b16 %v921
        %v1067 = vunpack.c.l.b16 %v922
        %v1068 = vpack.c.b16 %v1053, %v1052
        %v1069 = vpack.c.b16 %v1055, %v1054
        %v1070 = vpack.c.b16 %v1057, %v1056
        %v1071 = vpack.c.b16 %v1059, %v1058
        %v1072 = vpack.c.b16 %v1061, %v1060
        %v1073 = vpack.c.b16 %v1063, %v1062
        %v1074 = vpack.c.b16 %v1065, %v1064
        %v1075 = vpack.c.b16 %v1067, %v1066
        %1084 = vmatprep.subr.bf16.mxu0 0
        %1085 = vmatpush1.bf16.msra.mxu0 %v1068
        %1086 = vmatprep.subr.bf16.mxu0 0
        %1087 = vmatpush1.bf16.msra.mxu0 %v1069
        %1088 = vmatprep.subr.bf16.mxu0 0
        %1089 = vmatpush1.bf16.msra.mxu0 %v1070
        %1090 = vmatprep.subr.bf16.mxu0 0
        %1091 = vmatpush1.bf16.msra.mxu0 %v1071
        %1092 = vmatprep.subr.bf16.mxu0 0
        %1093 = vmatpush1.bf16.msra.mxu0 %v1072
        %1094 = vmatprep.subr.bf16.mxu0 0
        %1095 = vmatpush1.bf16.msra.mxu0 %v1073
        %1096 = vmatprep.subr.bf16.mxu0 0
        %1097 = vmatpush1.bf16.msra.mxu0 %v1074
        %1098 = vmatprep.subr.bf16.mxu0 0
        %1099 = vmatpush1.bf16.msra.mxu0 %v1075
        %1100 = vmatprep.subr.bf16.mxu0 0
        %1101 = vmatpush1.bf16.msra.mxu0 0
        %1102 = vmatprep.subr.bf16.mxu0 0
        %1103 = vmatpush1.bf16.msra.mxu0 0
        %1104 = vmatprep.subr.bf16.mxu0 0
        %1105 = vmatpush1.bf16.msra.mxu0 0
        %1106 = vmatprep.subr.bf16.mxu0 0
        %1107 = vmatpush1.bf16.msra.mxu0 0
        %1108 = vmatprep.subr.bf16.mxu0 0
        %1109 = vmatpush1.bf16.msra.mxu0 0
        %1110 = vmatprep.subr.bf16.mxu0 0
        %1111 = vmatpush1.bf16.msra.mxu0 0
        %1112 = vmatprep.subr.bf16.mxu0 0
        %1113 = vmatpush1.bf16.msra.mxu0 0
        %1114 = vmatprep.subr.bf16.mxu0 0
        %1115 = vmatpush1.bf16.msra.mxu0 0
        %1116 = vmatprep.mubr.bf16.mxu0 0
        %1117 = vmatmul.mubr.bf16.gmra.mrb[0].mxu0 %v1034
        %v1118 = vpop.f32.mrb[0].mxu0
        %v1119 = vadd.f32 %v1024, %v1118
        %v1120 = vpop.f32.mrb[0].mxu0
        %v1121 = vpop.f32.mrb[0].mxu0
        %v1122 = vpop.f32.mrb[0].mxu0
        %1123 = vdwg.mxu0
        %v1124 = vld [vmem:[#allocation2 + $0x4] sm:$0xe]
        %v1125 = vld [vmem:[#allocation2 + $0x8] sm:$0x1]
        %s1126 = scalar_lea.vmem [#allocation4], 512
        %v1127 = vld [vmem:[%s1126] sm:$0xf]
        %v1128 = vld [vmem:[%s1126 + $0x4] sm:$0xf]
        %v1129 = vld [vmem:[%s1126 + $0x8] sm:$0xf]
        %v1130 = vld [vmem:[%s1126 + $0xc] sm:$0xf]
        %v1131 = vld [vmem:[%s1126 + $0x10] sm:$0xf]
        %v1132 = vld [vmem:[%s1126 + $0x14] sm:$0xf]
        %v1133 = vld [vmem:[%s1126 + $0x18] sm:$0xf]
        %v1134 = vld [vmem:[%s1126 + $0x1c] sm:$0xf]
        %v1135 = vld [vmem:[%s1126 + $0x20] sm:$0xf]
        %v1136 = vld [vmem:[%s1126 + $0x24] sm:$0xf]
        %v1137 = vld [vmem:[%s1126 + $0x28] sm:$0xf]
        %v1138 = vld [vmem:[%s1126 + $0x2c] sm:$0xf]
        %v1139 = vld [vmem:[%s1126 + $0x30] sm:$0xf]
        %v1140 = vld [vmem:[%s1126 + $0x34] sm:$0xf]
        %v1141 = vld [vmem:[%s1126 + $0x38] sm:$0xf]
        %v1142 = vld [vmem:[%s1126 + $0x3c] sm:$0xf]
        %v1145 = vunpack.c.l.b16 %v1124
        %v1146 = vunpack.c.l.b16 %v1125
        %v1147 = vpack.c.b16 %v1146, %v1145
        %v1148 = vrot.slane %v1147, 1
        %v1166 = vunpack.c.l.b16 %v1127
        %v1167 = vunpack.c.l.b16 %v1128
        %v1168 = vunpack.c.l.b16 %v1129
        %v1169 = vunpack.c.l.b16 %v1130
        %v1170 = vunpack.c.l.b16 %v1131
        %v1171 = vunpack.c.l.b16 %v1132
        %v1172 = vunpack.c.l.b16 %v1133
        %v1173 = vunpack.c.l.b16 %v1134
        %v1174 = vunpack.c.l.b16 %v1135
        %v1175 = vunpack.c.l.b16 %v1136
        %v1176 = vunpack.c.l.b16 %v1137
        %v1177 = vunpack.c.l.b16 %v1138
        %v1178 = vunpack.c.l.b16 %v1139
        %v1179 = vunpack.c.l.b16 %v1140
        %v1180 = vunpack.c.l.b16 %v1141
        %v1181 = vunpack.c.l.b16 %v1142
        %v1182 = vpack.c.b16 %v1167, %v1166
        %v1183 = vpack.c.b16 %v1169, %v1168
        %v1184 = vpack.c.b16 %v1171, %v1170
        %v1185 = vpack.c.b16 %v1173, %v1172
        %v1186 = vpack.c.b16 %v1175, %v1174
        %v1187 = vpack.c.b16 %v1177, %v1176
        %v1188 = vpack.c.b16 %v1179, %v1178
        %v1189 = vpack.c.b16 %v1181, %v1180
        %1198 = vmatprep.subr.bf16.mxu0 0
        %1199 = vmatpush1.bf16.msra.mxu0 %v1182
        %1200 = vmatprep.subr.bf16.mxu0 0
        %1201 = vmatpush1.bf16.msra.mxu0 %v1183
        %1202 = vmatprep.subr.bf16.mxu0 0
        %1203 = vmatpush1.bf16.msra.mxu0 %v1184
        %1204 = vmatprep.subr.bf16.mxu0 0
        %1205 = vmatpush1.bf16.msra.mxu0 %v1185
        %1206 = vmatprep.subr.bf16.mxu0 0
        %1207 = vmatpush1.bf16.msra.mxu0 %v1186
        %1208 = vmatprep.subr.bf16.mxu0 0
        %1209 = vmatpush1.bf16.msra.mxu0 %v1187
        %1210 = vmatprep.subr.bf16.mxu0 0
        %1211 = vmatpush1.bf16.msra.mxu0 %v1188
        %1212 = vmatprep.subr.bf16.mxu0 0
        %1213 = vmatpush1.bf16.msra.mxu0 %v1189
        %1214 = vmatprep.subr.bf16.mxu0 0
        %1215 = vmatpush1.bf16.msra.mxu0 0
        %1216 = vmatprep.subr.bf16.mxu0 0
        %1217 = vmatpush1.bf16.msra.mxu0 0
        %1218 = vmatprep.subr.bf16.mxu0 0
        %1219 = vmatpush1.bf16.msra.mxu0 0
        %1220 = vmatprep.subr.bf16.mxu0 0
        %1221 = vmatpush1.bf16.msra.mxu0 0
        %1222 = vmatprep.subr.bf16.mxu0 0
        %1223 = vmatpush1.bf16.msra.mxu0 0
        %1224 = vmatprep.subr.bf16.mxu0 0
        %1225 = vmatpush1.bf16.msra.mxu0 0
        %1226 = vmatprep.subr.bf16.mxu0 0
        %1227 = vmatpush1.bf16.msra.mxu0 0
        %1228 = vmatprep.subr.bf16.mxu0 0
        %1229 = vmatpush1.bf16.msra.mxu0 0
        %1230 = vmatprep.mubr.bf16.mxu0 0
        %1231 = vmatmul.mubr.bf16.gmra.mrb[0].mxu0 %v1148
        %v1232 = vpop.f32.mrb[0].mxu0
        %v1233 = vadd.f32 0.0, %v1232
        %v1234 = vpop.f32.mrb[0].mxu0
        %v1235 = vpop.f32.mrb[0].mxu0
        %v1236 = vpop.f32.mrb[0].mxu0
        %1237 = vdwg.mxu0
        %v1238 = vadd.f32 %v1119, %v1233
        %s1239 = scalar_lea.vmem %s2, 2
        %v1240 = vld [vmem:[%s1239] sm:$0x1]
        %v1242 = vlaneseq
        %v1243 = vshrl.u32 %v1242, 7
        %v1244 = vsub.s32 0, %v1243
        %v1245 = vrot.slane %v1240, %v1244
        %v1247 = vadd.f32 %v1238, %v1245
        %v1248 = vmax.f32 %v1247, 0.0
        %v1249 = vpack.c.bf16 %v1248, %v1248
        %1250 = vst [vmem:[#allocation3 + $0x4] sm:$0xf] %v1249
        %v1251 = vld [vmem:[#allocation3] sm:$0x8]
        %v1252 = vld [vmem:[#allocation3 + $0x4] sm:$0x7]
        %s1253 = scalar_lea.vmem [#allocation4], 576
        %v1254 = vld [vmem:[%s1253] sm:$0xf]
        %v1255 = vld [vmem:[%s1253 + $0x4] sm:$0xf]
        %v1256 = vld [vmem:[%s1253 + $0x8] sm:$0xf]
        %v1257 = vld [vmem:[%s1253 + $0xc] sm:$0xf]
        %v1258 = vld [vmem:[%s1253 + $0x10] sm:$0xf]
        %v1259 = vld [vmem:[%s1253 + $0x14] sm:$0xf]
        %v1260 = vld [vmem:[%s1253 + $0x18] sm:$0xf]
        %v1261 = vld [vmem:[%s1253 + $0x1c] sm:$0xf]
        %v1262 = vld [vmem:[%s1253 + $0x20] sm:$0xf]
        %v1263 = vld [vmem:[%s1253 + $0x24] sm:$0xf]
        %v1264 = vld [vmem:[%s1253 + $0x28] sm:$0xf]
        %v1265 = vld [vmem:[%s1253 + $0x2c] sm:$0xf]
        %v1266 = vld [vmem:[%s1253 + $0x30] sm:$0xf]
        %v1267 = vld [vmem:[%s1253 + $0x34] sm:$0xf]
        %v1268 = vld [vmem:[%s1253 + $0x38] sm:$0xf]
        %v1269 = vld [vmem:[%s1253 + $0x3c] sm:$0xf]
        %v1270 = vld [vmem:[#allocation3 + $0x4] sm:$0xf]
        %s1271 = scalar_lea.vmem [#allocation4], 640
        %v1272 = vld [vmem:[%s1271] sm:$0xf]
        %v1273 = vld [vmem:[%s1271 + $0x4] sm:$0xf]
        %v1274 = vld [vmem:[%s1271 + $0x8] sm:$0xf]
        %v1275 = vld [vmem:[%s1271 + $0xc] sm:$0xf]
        %v1276 = vld [vmem:[%s1271 + $0x10] sm:$0xf]
        %v1277 = vld [vmem:[%s1271 + $0x14] sm:$0xf]
        %v1278 = vld [vmem:[%s1271 + $0x18] sm:$0xf]
        %v1279 = vld [vmem:[%s1271 + $0x1c] sm:$0xf]
        %v1280 = vld [vmem:[%s1271 + $0x20] sm:$0xf]
        %v1281 = vld [vmem:[%s1271 + $0x24] sm:$0xf]
        %v1282 = vld [vmem:[%s1271 + $0x28] sm:$0xf]
        %v1283 = vld [vmem:[%s1271 + $0x2c] sm:$0xf]
        %v1284 = vld [vmem:[%s1271 + $0x30] sm:$0xf]
        %v1285 = vld [vmem:[%s1271 + $0x34] sm:$0xf]
        %v1286 = vld [vmem:[%s1271 + $0x38] sm:$0xf]
        %v1287 = vld [vmem:[%s1271 + $0x3c] sm:$0xf]
        %v1304 = vunpack.c.l.b16 %v1272
        %v1305 = vunpack.c.l.b16 %v1273
        %v1306 = vunpack.c.l.b16 %v1274
        %v1307 = vunpack.c.l.b16 %v1275
        %v1308 = vunpack.c.l.b16 %v1276
        %v1309 = vunpack.c.l.b16 %v1277
        %v1310 = vunpack.c.l.b16 %v1278
        %v1311 = vunpack.c.l.b16 %v1279
        %v1312 = vunpack.c.l.b16 %v1280
        %v1313 = vunpack.c.l.b16 %v1281
        %v1314 = vunpack.c.l.b16 %v1282
        %v1315 = vunpack.c.l.b16 %v1283
        %v1316 = vunpack.c.l.b16 %v1284
        %v1317 = vunpack.c.l.b16 %v1285
        %v1318 = vunpack.c.l.b16 %v1286
        %v1319 = vunpack.c.l.b16 %v1287
        %v1320 = vpack.c.b16 %v1305, %v1304
        %v1321 = vpack.c.b16 %v1307, %v1306
        %v1322 = vpack.c.b16 %v1309, %v1308
        %v1323 = vpack.c.b16 %v1311, %v1310
        %v1324 = vpack.c.b16 %v1313, %v1312
        %v1325 = vpack.c.b16 %v1315, %v1314
        %v1326 = vpack.c.b16 %v1317, %v1316
        %v1327 = vpack.c.b16 %v1319, %v1318
        %1336 = vmatprep.subr.bf16.mxu0 0
        %1337 = vmatpush1.bf16.msra.mxu0 %v1320
        %1338 = vmatprep.subr.bf16.mxu0 0
        %1339 = vmatpush1.bf16.msra.mxu0 %v1321
        %1340 = vmatprep.subr.bf16.mxu0 0
        %1341 = vmatpush1.bf16.msra.mxu0 %v1322
        %1342 = vmatprep.subr.bf16.mxu0 0
        %1343 = vmatpush1.bf16.msra.mxu0 %v1323
        %1344 = vmatprep.subr.bf16.mxu0 0
        %1345 = vmatpush1.bf16.msra.mxu0 %v1324
        %1346 = vmatprep.subr.bf16.mxu0 0
        %1347 = vmatpush1.bf16.msra.mxu0 %v1325
        %1348 = vmatprep.subr.bf16.mxu0 0
        %1349 = vmatpush1.bf16.msra.mxu0 %v1326
        %1350 = vmatprep.subr.bf16.mxu0 0
        %1351 = vmatpush1.bf16.msra.mxu0 %v1327
        %1352 = vmatprep.subr.bf16.mxu0 0
        %1353 = vmatpush1.bf16.msra.mxu0 0
        %1354 = vmatprep.subr.bf16.mxu0 0
        %1355 = vmatpush1.bf16.msra.mxu0 0
        %1356 = vmatprep.subr.bf16.mxu0 0
        %1357 = vmatpush1.bf16.msra.mxu0 0
        %1358 = vmatprep.subr.bf16.mxu0 0
        %1359 = vmatpush1.bf16.msra.mxu0 0
        %1360 = vmatprep.subr.bf16.mxu0 0
        %1361 = vmatpush1.bf16.msra.mxu0 0
        %1362 = vmatprep.subr.bf16.mxu0 0
        %1363 = vmatpush1.bf16.msra.mxu0 0
        %1364 = vmatprep.subr.bf16.mxu0 0
        %1365 = vmatpush1.bf16.msra.mxu0 0
        %1366 = vmatprep.subr.bf16.mxu0 0
        %1367 = vmatpush1.bf16.msra.mxu0 0
        %1368 = vmatprep.mubr.bf16.mxu0 0
        %1369 = vmatmul.mubr.bf16.gmra.mrb[0].mxu0 %v1270
        %v1370 = vpop.f32.mrb[0].mxu0
        %v1371 = vadd.f32 0.0, %v1370
        %v1372 = vpop.f32.mrb[0].mxu0
        %v1373 = vpop.f32.mrb[0].mxu0
        %v1374 = vpop.f32.mrb[0].mxu0
        %1375 = vdwg.mxu0
        %v1378 = vunpack.c.l.b16 %v1251
        %v1379 = vunpack.c.l.b16 %v1252
        %v1380 = vpack.c.b16 %v1379, %v1378
        %v1381 = vrot.slane %v1380, 3
        %v1399 = vunpack.c.l.b16 %v1254
        %v1400 = vunpack.c.l.b16 %v1255
        %v1401 = vunpack.c.l.b16 %v1256
        %v1402 = vunpack.c.l.b16 %v1257
        %v1403 = vunpack.c.l.b16 %v1258
        %v1404 = vunpack.c.l.b16 %v1259
        %v1405 = vunpack.c.l.b16 %v1260
        %v1406 = vunpack.c.l.b16 %v1261
        %v1407 = vunpack.c.l.b16 %v1262
        %v1408 = vunpack.c.l.b16 %v1263
        %v1409 = vunpack.c.l.b16 %v1264
        %v1410 = vunpack.c.l.b16 %v1265
        %v1411 = vunpack.c.l.b16 %v1266
        %v1412 = vunpack.c.l.b16 %v1267
        %v1413 = vunpack.c.l.b16 %v1268
        %v1414 = vunpack.c.l.b16 %v1269
        %v1415 = vpack.c.b16 %v1400, %v1399
        %v1416 = vpack.c.b16 %v1402, %v1401
        %v1417 = vpack.c.b16 %v1404, %v1403
        %v1418 = vpack.c.b16 %v1406, %v1405
        %v1419 = vpack.c.b16 %v1408, %v1407
        %v1420 = vpack.c.b16 %v1410, %v1409
        %v1421 = vpack.c.b16 %v1412, %v1411
        %v1422 = vpack.c.b16 %v1414, %v1413
        %1431 = vmatprep.subr.bf16.mxu0 0
        %1432 = vmatpush1.bf16.msra.mxu0 %v1415
        %1433 = vmatprep.subr.bf16.mxu0 0
        %1434 = vmatpush1.bf16.msra.mxu0 %v1416
        %1435 = vmatprep.subr.bf16.mxu0 0
        %1436 = vmatpush1.bf16.msra.mxu0 %v1417
        %1437 = vmatprep.subr.bf16.mxu0 0
        %1438 = vmatpush1.bf16.msra.mxu0 %v1418
        %1439 = vmatprep.subr.bf16.mxu0 0
        %1440 = vmatpush1.bf16.msra.mxu0 %v1419
        %1441 = vmatprep.subr.bf16.mxu0 0
        %1442 = vmatpush1.bf16.msra.mxu0 %v1420
        %1443 = vmatprep.subr.bf16.mxu0 0
        %1444 = vmatpush1.bf16.msra.mxu0 %v1421
        %1445 = vmatprep.subr.bf16.mxu0 0
        %1446 = vmatpush1.bf16.msra.mxu0 %v1422
        %1447 = vmatprep.subr.bf16.mxu0 0
        %1448 = vmatpush1.bf16.msra.mxu0 0
        %1449 = vmatprep.subr.bf16.mxu0 0
        %1450 = vmatpush1.bf16.msra.mxu0 0
        %1451 = vmatprep.subr.bf16.mxu0 0
        %1452 = vmatpush1.bf16.msra.mxu0 0
        %1453 = vmatprep.subr.bf16.mxu0 0
        %1454 = vmatpush1.bf16.msra.mxu0 0
        %1455 = vmatprep.subr.bf16.mxu0 0
        %1456 = vmatpush1.bf16.msra.mxu0 0
        %1457 = vmatprep.subr.bf16.mxu0 0
        %1458 = vmatpush1.bf16.msra.mxu0 0
        %1459 = vmatprep.subr.bf16.mxu0 0
        %1460 = vmatpush1.bf16.msra.mxu0 0
        %1461 = vmatprep.subr.bf16.mxu0 0
        %1462 = vmatpush1.bf16.msra.mxu0 0
        %1463 = vmatprep.mubr.bf16.mxu0 0
        %1464 = vmatmul.mubr.bf16.gmra.mrb[0].mxu0 %v1381
        %v1465 = vpop.f32.mrb[0].mxu0
        %v1466 = vadd.f32 %v1371, %v1465
        %v1467 = vpop.f32.mrb[0].mxu0
        %v1468 = vpop.f32.mrb[0].mxu0
        %v1469 = vpop.f32.mrb[0].mxu0
        %1470 = vdwg.mxu0
        %v1471 = vld [vmem:[#allocation3 + $0x4] sm:$0xe]
        %v1472 = vld [vmem:[#allocation3 + $0x8] sm:$0x1]
        %s1473 = scalar_lea.vmem [#allocation4], 704
        %v1474 = vld [vmem:[%s1473] sm:$0xf]
        %v1475 = vld [vmem:[%s1473 + $0x4] sm:$0xf]
        %v1476 = vld [vmem:[%s1473 + $0x8] sm:$0xf]
        %v1477 = vld [vmem:[%s1473 + $0xc] sm:$0xf]
        %v1478 = vld [vmem:[%s1473 + $0x10] sm:$0xf]
        %v1479 = vld [vmem:[%s1473 + $0x14] sm:$0xf]
        %v1480 = vld [vmem:[%s1473 + $0x18] sm:$0xf]
        %v1481 = vld [vmem:[%s1473 + $0x1c] sm:$0xf]
        %v1482 = vld [vmem:[%s1473 + $0x20] sm:$0xf]
        %v1483 = vld [vmem:[%s1473 + $0x24] sm:$0xf]
        %v1484 = vld [vmem:[%s1473 + $0x28] sm:$0xf]
        %v1485 = vld [vmem:[%s1473 + $0x2c] sm:$0xf]
        %v1486 = vld [vmem:[%s1473 + $0x30] sm:$0xf]
        %v1487 = vld [vmem:[%s1473 + $0x34] sm:$0xf]
        %v1488 = vld [vmem:[%s1473 + $0x38] sm:$0xf]
        %v1489 = vld [vmem:[%s1473 + $0x3c] sm:$0xf]
        %v1492 = vunpack.c.l.b16 %v1471
        %v1493 = vunpack.c.l.b16 %v1472
        %v1494 = vpack.c.b16 %v1493, %v1492
        %v1495 = vrot.slane %v1494, 1
        %v1513 = vunpack.c.l.b16 %v1474
        %v1514 = vunpack.c.l.b16 %v1475
        %v1515 = vunpack.c.l.b16 %v1476
        %v1516 = vunpack.c.l.b16 %v1477
        %v1517 = vunpack.c.l.b16 %v1478
        %v1518 = vunpack.c.l.b16 %v1479
        %v1519 = vunpack.c.l.b16 %v1480
        %v1520 = vunpack.c.l.b16 %v1481
        %v1521 = vunpack.c.l.b16 %v1482
        %v1522 = vunpack.c.l.b16 %v1483
        %v1523 = vunpack.c.l.b16 %v1484
        %v1524 = vunpack.c.l.b16 %v1485
        %v1525 = vunpack.c.l.b16 %v1486
        %v1526 = vunpack.c.l.b16 %v1487
        %v1527 = vunpack.c.l.b16 %v1488
        %v1528 = vunpack.c.l.b16 %v1489
        %v1529 = vpack.c.b16 %v1514, %v1513
        %v1530 = vpack.c.b16 %v1516, %v1515
        %v1531 = vpack.c.b16 %v1518, %v1517
        %v1532 = vpack.c.b16 %v1520, %v1519
        %v1533 = vpack.c.b16 %v1522, %v1521
        %v1534 = vpack.c.b16 %v1524, %v1523
        %v1535 = vpack.c.b16 %v1526, %v1525
        %v1536 = vpack.c.b16 %v1528, %v1527
        %1545 = vmatprep.subr.bf16.mxu0 0
        %1546 = vmatpush1.bf16.msra.mxu0 %v1529
        %1547 = vmatprep.subr.bf16.mxu0 0
        %1548 = vmatpush1.bf16.msra.mxu0 %v1530
        %1549 = vmatprep.subr.bf16.mxu0 0
        %1550 = vmatpush1.bf16.msra.mxu0 %v1531
        %1551 = vmatprep.subr.bf16.mxu0 0
        %1552 = vmatpush1.bf16.msra.mxu0 %v1532
        %1553 = vmatprep.subr.bf16.mxu0 0
        %1554 = vmatpush1.bf16.msra.mxu0 %v1533
        %1555 = vmatprep.subr.bf16.mxu0 0
        %1556 = vmatpush1.bf16.msra.mxu0 %v1534
        %1557 = vmatprep.subr.bf16.mxu0 0
        %1558 = vmatpush1.bf16.msra.mxu0 %v1535
        %1559 = vmatprep.subr.bf16.mxu0 0
        %1560 = vmatpush1.bf16.msra.mxu0 %v1536
        %1561 = vmatprep.subr.bf16.mxu0 0
        %1562 = vmatpush1.bf16.msra.mxu0 0
        %1563 = vmatprep.subr.bf16.mxu0 0
        %1564 = vmatpush1.bf16.msra.mxu0 0
        %1565 = vmatprep.subr.bf16.mxu0 0
        %1566 = vmatpush1.bf16.msra.mxu0 0
        %1567 = vmatprep.subr.bf16.mxu0 0
        %1568 = vmatpush1.bf16.msra.mxu0 0
        %1569 = vmatprep.subr.bf16.mxu0 0
        %1570 = vmatpush1.bf16.msra.mxu0 0
        %1571 = vmatprep.subr.bf16.mxu0 0
        %1572 = vmatpush1.bf16.msra.mxu0 0
        %1573 = vmatprep.subr.bf16.mxu0 0
        %1574 = vmatpush1.bf16.msra.mxu0 0
        %1575 = vmatprep.subr.bf16.mxu0 0
        %1576 = vmatpush1.bf16.msra.mxu0 0
        %1577 = vmatprep.mubr.bf16.mxu0 0
        %1578 = vmatmul.mubr.bf16.gmra.mrb[0].mxu0 %v1495
        %v1579 = vpop.f32.mrb[0].mxu0
        %v1580 = vadd.f32 0.0, %v1579
        %v1581 = vpop.f32.mrb[0].mxu0
        %v1582 = vpop.f32.mrb[0].mxu0
        %v1583 = vpop.f32.mrb[0].mxu0
        %1584 = vdwg.mxu0
        %v1585 = vadd.f32 %v1466, %v1580
        %s1586 = scalar_lea.vmem %s2, 3
        %v1587 = vld [vmem:[%s1586] sm:$0x1]
        %v1589 = vlaneseq
        %v1590 = vshrl.u32 %v1589, 7
        %v1591 = vsub.s32 0, %v1590
        %v1592 = vrot.slane %v1587, %v1591
        %v1594 = vadd.f32 %v1585, %v1592
        %v1595 = vmax.f32 %v1594, 0.0
        %v1596 = vpack.c.bf16 %v1595, %v1595
        %1597 = vst [vmem:[%s180] sm:$0xf] %v1596
        %p1598 = scmp.lt.s32.totalorder %s15, 1
        %s1599 = scalar_select %p1598, %s15, 1
        %s1600 = smul.addr %s1599, 4
        %s1601 = scalar_lea.vmem %s3, %s1600
        // Predicated region
        $region37: #{_tcn_forward_impl.1} parent=31 // pred_check
          %p1602 = pneg %p101
        $region38: #{_tcn_forward_impl.1} parent=31 // pred_check_branch
          %1604 = sbr.rel (%p1602) target = $region40
        $region39: #{_tcn_forward_impl.1} parent=31 // pred_region
          _
        $region40: #{_tcn_forward_impl.1} parent=31 // pred_fallthru
          _
      $region32: #{_tcn_forward_impl.1} parent=5 // pred_fallthru
        _
      %p1605 = scmp.le.s32.totalorder 2, %s10
      // Predicated region
      $region41: #{_tcn_forward_impl.1} parent=5 // pred_check
        %p1606 = pneg %p1605
      $region42: #{_tcn_forward_impl.1} parent=5 // pred_check_branch
        %1608 = sbr.rel (%p1606) target = $region44
      $region43: #{_tcn_forward_impl.1} parent=5 // pred_region
        %s1609 = ssub.s32 %s10, 2
        // Predicated region
        $region45: #{_tcn_forward_impl.1} parent=43 // pred_check
          %p1610 = pneg %p107
        $region46: #{_tcn_forward_impl.1} parent=43 // pred_check_branch
          %1612 = sbr.rel (%p1610) target = $region48
        $region47: #{_tcn_forward_impl.1} parent=43 // pred_region
          %p1613 = scmp.lt.s32.totalorder %s16, 1
          %s1614 = scalar_select %p1613, %s16, 1
          %s1615 = smul.addr %s1614, 4
          %s1616 = scalar_lea.vmem %s3, %s1615
        $region48: #{_tcn_forward_impl.1} parent=43 // pred_fallthru
          _
      $region44: #{_tcn_forward_impl.1} parent=5 // pred_fallthru
        _
    $region6: #{_tcn_forward_impl.1} parent=1 // loop_footer
      %s14 = sadd.s32 1, %s10
    $region7: #{_tcn_forward_impl.1} parent=1 // loop_footer_branch
      %9 = sbr.rel target = $region3
    $region8: #{_tcn_forward_impl.1} parent=1 // loop_exit
      _
    %1617 = vsyncpa [#allocation5], 1
    %s1618 = scalar_lea.sflag [#allocation5], 1
    %1619 = vsyncpa %s1618, 1

</llo_original>
